<compile_context>
chip_gen: v7x
topology: tpu7x:2x2x1
jax: 0.10.0
libtpu: 0.0.40
codegen_flags: <defaults>
</compile_context>

<pallas_src>
import functools

import jax
import jax.numpy as jnp
from jax import lax
from jax.experimental import pallas as pl
from jax.experimental.pallas import tpu as pltpu

# --- LIF default parameters (norse LIFParameters defaults) -------------------
TAU_SYN_INV = 1.0 / 5e-3   # 200.0
TAU_MEM_INV = 1.0 / 1e-2   # 100.0
V_LEAK = 0.0
V_TH = 1.0
V_RESET = 0.0
DT = 1e-3

_LANE = 128
_SUBLANE = 8


def _round_up(n, m):
    return ((n + m - 1) // m) * m


# -----------------------------------------------------------------------------
# Kernel
# -----------------------------------------------------------------------------
def _lif_seq_kernel(i_in_ref, state_in_ref, w_rec_ref, z_seq_ref, state_ref,
                    *, seq_len, time_block, dt, tau_syn_inv, tau_mem_inv,
                    v_leak, v_th, v_reset):
    """One grid step == `time_block` timesteps of the recurrent LIF cell.

    state_ref is the resident packed output slab [z | v | i] along lanes; it is
    both the carried recurrent state and the final-state output (accumulator
    pattern, written back to HBM only when the batch-tile changes / at the end).
    i_in_ref holds the pre-computed input currents x @ W_in.T for this time
    block (the input projection is hoisted out of the serial loop).
    """
    tb = pl.program_id(1)                 # time-block index (arbitrary axis)
    hp = z_seq_ref.shape[-1]              # padded hidden size (multiple of 128)

    @pl.when(tb == 0)
    def _():
        state_ref[...] = state_in_ref[...]

    # Hoist the resident weight load out of the unrolled time loop.
    w_rec = w_rec_ref[...]

    def step(t, carry):
        @pl.when(tb * time_block + t < seq_len)   # mask padded timesteps
        def _():
            z = state_ref[:, 0 * hp:1 * hp]
            v = state_ref[:, 1 * hp:2 * hp]
            i = state_ref[:, 2 * hp:3 * hp]

            # membrane / synaptic decay (VPU, f32)
            dv = dt * tau_mem_inv * ((v_leak - v) + i)
            v_decayed = v + dv
            i_decayed = i - dt * tau_syn_inv * i

            # spike generation (strict > 0, like torch.heaviside(x, 0.0))
            z_new = (v_decayed - v_th > 0.0).astype(jnp.float32)
            v_new = (1.0 - z_new) * v_decayed + z_new * v_reset

            # recurrent projection only (input projection was hoisted).
            # Uses the *previous* spike z (pre-update), matching norse lif_step.
            i_jump = jnp.dot(z.astype(w_rec.dtype), w_rec,
                             preferred_element_type=jnp.float32)
            i_new = i_decayed + i_in_ref[t] + i_jump

            z_seq_ref[t] = z_new
            # static 128-aligned slice stores (no lane-axis concatenation)
            state_ref[:, 0 * hp:1 * hp] = z_new
            state_ref[:, 1 * hp:2 * hp] = v_new
            state_ref[:, 2 * hp:3 * hp] = i_new
        return carry

    lax.fori_loop(0, time_block, step, 0, unroll=True)


# -----------------------------------------------------------------------------
# One-time (hoisted) weight preparation
# -----------------------------------------------------------------------------
def prepare_weights(input_weights, recurrent_weights, matmul_dtype=jnp.bfloat16):
    """Hoisted weight prep (run once, outside the recurrence).

    input_weights:     (hidden, input)   -- used by the hoisted projection (f32)
    recurrent_weights: (hidden, hidden)  -- transposed, zero-padded to lane
                                            multiples and cast to `matmul_dtype`
    Returns (w_in_f32, w_rec_t_padded) where w_rec_t_padded has shape (Hp, Hp).
    """
    h = recurrent_weights.shape[0]
    hp = _round_up(h, _LANE)
    w_rec_t = jnp.zeros((hp, hp), matmul_dtype).at[:h, :h].set(
        recurrent_weights.T.astype(matmul_dtype))
    return jnp.asarray(input_weights, jnp.float32), w_rec_t


# -----------------------------------------------------------------------------
# Fused multi-timestep wrapper
# -----------------------------------------------------------------------------
@functools.partial(jax.jit,
                   static_argnames=("hidden_size", "dt", "time_block",
                                    "batch_block"))
def lif_recurrent_sequence(x_seq, state, w_in, w_rec_t, *, hidden_size, dt=DT,
                           time_block=8, batch_block=None):
    """Fused multi-timestep recurrent LIF cell.

    x_seq: (T, B, input_size); state = (z, v, i), each (B, hidden_size).
    w_in / w_rec_t come from `prepare_weights`.
    Returns (z_seq (T, B, H), (z_T, v_T, i_T)).
    Each timestep has exactly the semantics of SNNRecurrentCell.forward.
    """
    T, B, K = x_seq.shape
    H = hidden_size
    Hp = _round_up(H, _LANE)
    assert w_rec_t.shape == (Hp, Hp), (w_rec_t.shape, (Hp, Hp))

    bt = batch_block if batch_block is not None else _round_up(B, _SUBLANE)
    assert bt % _SUBLANE == 0, "batch_block must be a multiple of 8"
    Bp = _round_up(B, bt)
    tt = int(time_block)
    Tp = _round_up(T, tt)
    nb, nt = Bp // bt, Tp // tt

    z0, v0, i0 = state

    # (1) Hoisted input projection: one big matmul over all T*B rows
    # (near-full MXU row occupancy), never serialized over time.
    i_in = jnp.einsum("tbk,hk->tbh", x_seq.astype(jnp.float32),
                      w_in.astype(jnp.float32),
                      preferred_element_type=jnp.float32)
    # Lane-dense padded layouts (zero padding is dynamics-neutral: padded lanes
    # have v = i = 0 and never spike since v_th > 0; padded weight rows/cols
    # and padded i_in lanes/timesteps are zero).  Done once per sequence.
    i_in_p = jnp.zeros((Tp, Bp, Hp), jnp.float32).at[:T, :B, :H].set(i_in)
    sp = (jnp.zeros((Bp, 3 * Hp), jnp.float32)
          .at[:B, 0 * Hp:0 * Hp + H].set(z0.astype(jnp.float32))
          .at[:B, 1 * Hp:1 * Hp + H].set(v0.astype(jnp.float32))
          .at[:B, 2 * Hp:2 * Hp + H].set(i0.astype(jnp.float32)))

    kernel = functools.partial(
        _lif_seq_kernel, seq_len=T, time_block=tt, dt=dt,
        tau_syn_inv=TAU_SYN_INV, tau_mem_inv=TAU_MEM_INV,
        v_leak=V_LEAK, v_th=V_TH, v_reset=V_RESET)

    # Explicit scoped-VMEM budget: resident weight (x2 buffers) + pipelined
    # i_in / z_seq blocks (x2 each) + packed state (in + resident out), with
    # headroom; clamped to stay under every generation's physical VMEM.
    w_bytes = Hp * Hp * jnp.dtype(w_rec_t.dtype).itemsize
    stream_blk = tt * bt * Hp * 4
    state_blk = bt * 3 * Hp * 4
    need = 2 * w_bytes + 4 * stream_blk + 4 * state_blk
    vmem_limit = int(min(max(2 * need + (8 << 20), 32 << 20), 64 << 20))

    grid_spec = pltpu.PrefetchScalarGridSpec(
        num_scalar_prefetch=0,
        grid=(nb, nt),
        in_specs=[
            pl.BlockSpec((tt, bt, Hp), lambda b, t: (t, b, 0)),   # i_in block (pipelined)
            pl.BlockSpec((bt, 3 * Hp), lambda b, t: (b, 0)),      # packed state_0
            pl.BlockSpec((Hp, Hp), lambda b, t: (0, 0)),          # W_rec.T (HBM-read-once, resident)
        ],
        out_specs=[
            pl.BlockSpec((tt, bt, Hp), lambda b, t: (t, b, 0)),   # spikes per time block
            pl.BlockSpec((bt, 3 * Hp), lambda b, t: (b, 0)),      # packed final state (resident)
        ],
    )

    z_seq_p, state_p = pl.pallas_call(
        kernel,
        out_shape=(jax.ShapeDtypeStruct((Tp, Bp, Hp), jnp.float32),
                   jax.ShapeDtypeStruct((Bp, 3 * Hp), jnp.float32)),
        grid_spec=grid_spec,
        # P8: reuse the packed state-in HBM buffer for the final-state output.
        input_output_aliases={1: 1},
        compiler_params=pltpu.CompilerParams(
            dimension_semantics=("parallel", "arbitrary"),   # batch || , time carries state
            vmem_limit_bytes=vmem_limit),
    )(i_in_p, sp, w_rec_t)

    z_seq = z_seq_p[:T, :B, :H]
    z_f = state_p[:B, 0 * Hp:0 * Hp + H]
    v_f = state_p[:B, 1 * Hp:1 * Hp + H]
    i_f = state_p[:B, 2 * Hp:2 * Hp + H]
    return z_seq, (z_f, v_f, i_f)


def snn_recurrent_cell_forward(x, state, w_in, w_rec_t, *, hidden_size, dt=DT):
    """Single-step forward matching SNNRecurrentCell.forward:
    returns (z_new, (z_new, v_new, i_new))."""
    z_seq, new_state = lif_recurrent_sequence(
        x[None], state, w_in, w_rec_t, hidden_size=hidden_size, dt=dt)
    return z_seq[0], new_state


# --- pure-JAX reference (norse lif_step semantics, step by step) --------------
def _reference_sequence(x_seq, state, w_in, w_rec, dt=DT):
    z, v, i = state
    zs = []
    for t in range(x_seq.shape[0]):
        dv = dt * TAU_MEM_INV * ((V_LEAK - v) + i)
        v_decayed = v + dv
        i_decayed = i - dt * TAU_SYN_INV * i
        z_new = (v_decayed - V_TH > 0.0).astype(v.dtype)
        v_new = (1.0 - z_new) * v_decayed + z_new * V_RESET
        i_new = i_decayed + z @ w_rec.T + x_seq[t] @ w_in.T
        zs.append(z_new)
        z, v, i = z_new, v_new, i_new
    return jnp.stack(zs), (z, v, i)


if __name__ == "__main__":
    key = jax.random.PRNGKey(0)
    k_x, k_z, k_v, k_i, k_wi, k_wr = jax.random.split(key, 6)

    seq_len = 12          # deliberately NOT a multiple of time_block=8
    batch = 8
    input_size = 32
    hidden_size = 32

    # Deterministic "randn * sqrt(2/hidden)" init, like the module's __init__.
    w_in = jax.random.normal(k_wi, (hidden_size, input_size), jnp.float32) * jnp.sqrt(
        2.0 / hidden_size)
    w_rec = jax.random.normal(k_wr, (hidden_size, hidden_size), jnp.float32) * jnp.sqrt(
        2.0 / hidden_size)
    # autapses=False: zero the recurrent diagonal
    w_rec = w_rec * (1.0 - jnp.eye(hidden_size, dtype=jnp.float32))

    x_seq = jax.random.normal(k_x, (seq_len, batch, input_size), jnp.float32)
    z0 = (jax.random.uniform(k_z, (batch, hidden_size)) > 0.5).astype(jnp.float32)
    v0 = jax.random.normal(k_v, (batch, hidden_size), jnp.float32)
    i0 = jax.random.normal(k_i, (batch, hidden_size), jnp.float32)
    state0 = (z0, v0, i0)

    # ---- exactness run: f32 recurrent weights --------------------------------
    w_in_f, w_rec_t_f = prepare_weights(w_in, w_rec, matmul_dtype=jnp.float32)
    z_seq, (z_f, v_f, i_f) = lif_recurrent_sequence(
        x_seq, state0, w_in_f, w_rec_t_f, hidden_size=hidden_size)
    jax.block_until_ready((z_seq, z_f, v_f, i_f))

    z_seq_r, (z_fr, v_fr, i_fr) = _reference_sequence(x_seq, state0, w_in, w_rec)
    assert jnp.array_equal(z_seq, z_seq_r), "spike sequence mismatch"
    assert jnp.allclose(v_f, v_fr, rtol=1e-4, atol=1e-4), "final voltage mismatch"
    assert jnp.allclose(i_f, i_fr, rtol=1e-4, atol=1e-4), "final current mismatch"

    # Single-step call (module-equivalent forward signature).
    z1, (z1s, v1s, i1s) = snn_recurrent_cell_forward(
        x_seq[0], state0, w_in_f, w_rec_t_f, hidden_size=hidden_size)
    jax.block_until_ready((z1, z1s, v1s, i1s))
    _, (z1r, v1r, i1r) = _reference_sequence(x_seq[:1], state0, w_in, w_rec)
    assert jnp.array_equal(z1, z1r), "single-step spike mismatch"
    assert jnp.allclose(v1s, v1r, rtol=1e-4, atol=1e-4), "single-step voltage mismatch"
    assert jnp.allclose(i1s, i1r, rtol=1e-4, atol=1e-4), "single-step current mismatch"

    # ---- performance-default run: bf16 recurrent weights ---------------------
    # (spikes are exactly {0,1}; bf16 weight rounding perturbs i near the
    # threshold, so only sanity checks here — expected quantization effect.)
    w_in_b, w_rec_t_b = prepare_weights(w_in, w_rec)        # default bf16
    z_b, (zb_f, vb_f, ib_f) = lif_recurrent_sequence(
        x_seq, state0, w_in_b, w_rec_t_b, hidden_size=hidden_size)
    jax.block_until_ready((z_b, zb_f, vb_f, ib_f))
    assert z_b.shape == (seq_len, batch, hidden_size)
    assert bool(jnp.all((z_b == 0.0) | (z_b == 1.0))), "bf16 spikes not binary"
    assert bool(jnp.all(jnp.isfinite(vb_f))) and bool(jnp.all(jnp.isfinite(ib_f)))

    print("KERNEL_OK")
</pallas_src>

<mosaic_0001>
module attributes {stable_mosaic.version = 11 : i64} {
  func.func @_lif_seq_kernel(%arg0: i32, %arg1: i32, %arg2: memref<8x8x128xf32, #tpu.memory_space<vmem>>, %arg3: memref<8x384xf32, #tpu.memory_space<vmem>>, %arg4: memref<128x128xf32, #tpu.memory_space<vmem>>, %arg5: memref<8x8x128xf32, #tpu.memory_space<vmem>>, %arg6: memref<8x384xf32, #tpu.memory_space<vmem>>) attributes {dimension_semantics = [#tpu.dimension_semantics<parallel>, #tpu.dimension_semantics<arbitrary>], iteration_bounds = array<i64: 1, 2>, scalar_prefetch = 0 : i64, scratch_operands = 0 : i64, tpu.core_type = #tpu.core_type<tc>, window_params = [{transform_indices = @transform_0, window_bounds = array<i64: 8, 8, 128>}, {transform_indices = @transform_1, window_bounds = array<i64: 8, 384>}, {pipeline_mode = #tpu.pipeline_mode<synchronous>, transform_indices = @transform_2, window_bounds = array<i64: 128, 128>}, {transform_indices = @transform_3, window_bounds = array<i64: 8, 8, 128>}, {transform_indices = @transform_4, window_bounds = array<i64: 8, 384>}]} {
    %c0_i32 = arith.constant 0 : i32
    %0 = arith.cmpi eq, %arg1, %c0_i32 : i32
    %1 = arith.extui %0 : i1 to i32
    %c0_i32_0 = arith.constant 0 : i32
    %2 = arith.cmpi ne, %1, %c0_i32_0 : i32
    scf.if %2 {
      %c0_26 = arith.constant 0 : index
      %c0_27 = arith.constant 0 : index
      %44 = vector.load %arg3[%c0_26, %c0_27] : memref<8x384xf32, #tpu.memory_space<vmem>>, vector<8x384xf32>
      %c0_28 = arith.constant 0 : index
      %c0_29 = arith.constant 0 : index
      %45 = vector.load %arg6[%c0_28, %c0_29] : memref<8x384xf32, #tpu.memory_space<vmem>>, vector<8x384xf32>
      tpu.vector_store %arg6[%c0_28, %c0_29], %44 {strides = array<i32>} : memref<8x384xf32, #tpu.memory_space<vmem>>, vector<8x384xf32>,
    } else {
    }
    %c0 = arith.constant 0 : index
    %c0_1 = arith.constant 0 : index
    %3 = vector.load %arg4[%c0, %c0_1] : memref<128x128xf32, #tpu.memory_space<vmem>>, vector<128x128xf32>
    %c0_i32_2 = arith.constant 0 : i32
    %c8_i32 = arith.constant 8 : i32
    %4 = arith.muli %arg1, %c8_i32 : i32
    %5 = arith.addi %4, %c0_i32_2 : i32
    %c12_i32 = arith.constant 12 : i32
    %6 = arith.cmpi slt, %5, %c12_i32 : i32
    %7 = arith.extui %6 : i1 to i32
    %c0_i32_3 = arith.constant 0 : i32
    %8 = arith.cmpi ne, %7, %c0_i32_3 : i32
    scf.if %8 {
      %c0_26 = arith.constant 0 : index
      %c0_27 = arith.constant 0 : index
      %44 = vector.load %arg6[%c0_26, %c0_27] : memref<8x384xf32, #tpu.memory_space<vmem>>, vector<8x128xf32>
      %c0_28 = arith.constant 0 : index
      %c128 = arith.constant 128 : index
      %45 = vector.load %arg6[%c0_28, %c128] : memref<8x384xf32, #tpu.memory_space<vmem>>, vector<8x128xf32>
      %c0_29 = arith.constant 0 : index
      %c256 = arith.constant 256 : index
      %46 = vector.load %arg6[%c0_29, %c256] : memref<8x384xf32, #tpu.memory_space<vmem>>, vector<8x128xf32>
      %cst = arith.constant 0.000000e+00 : f32
      %47 = vector.broadcast %cst : f32 to vector<8x128xf32>
      %48 = arith.subf %47, %45 : vector<8x128xf32>
      %49 = arith.addf %48, %46 : vector<8x128xf32>
      %cst_30 = arith.constant 1.000000e-01 : f32
      %50 = vector.broadcast %cst_30 : f32 to vector<8x128xf32>
      %51 = arith.mulf %50, %49 : vector<8x128xf32>
      %52 = arith.addf %45, %51 : vector<8x128xf32>
      %cst_31 = arith.constant 2.000000e-01 : f32
      %53 = vector.broadcast %cst_31 : f32 to vector<8x128xf32>
      %54 = arith.mulf %53, %46 : vector<8x128xf32>
      %55 = arith.subf %46, %54 : vector<8x128xf32>
      %cst_32 = arith.constant 1.000000e+00 : f32
      %56 = vector.broadcast %cst_32 : f32 to vector<8x128xf32>
      %57 = arith.subf %52, %56 : vector<8x128xf32>
      %cst_33 = arith.constant 0.000000e+00 : f32
      %58 = vector.broadcast %cst_33 : f32 to vector<8x128xf32>
      %59 = arith.cmpf ogt, %57, %58 : vector<8x128xf32>
      %60 = arith.extui %59 : vector<8x128xi1> to vector<8x128xi32>
      %61 = arith.sitofp %60 : vector<8x128xi32> to vector<8x128xf32>
      %cst_34 = arith.constant 1.000000e+00 : f32
      %62 = vector.broadcast %cst_34 : f32 to vector<8x128xf32>
      %63 = arith.subf %62, %61 : vector<8x128xf32>
      %64 = arith.mulf %63, %52 : vector<8x128xf32>
      %cst_35 = arith.constant 0.000000e+00 : f32
      %65 = vector.broadcast %cst_35 : f32 to vector<8x128xf32>
      %66 = arith.mulf %61, %65 : vector<8x128xf32>
      %67 = arith.addf %64, %66 : vector<8x128xf32>
      %cst_36 = arith.constant dense<0.000000e+00> : vector<8x128xf32>
      %68 = tpu.matmul %44, %3, %cst_36 {dimension_numbers = #tpu.dot_dimension_numbers<[1], [0], [0], [1], [0, 0, 1, 1], [], []>} : vector<8x128xf32>, vector<128x128xf32>, vector<8x128xf32> -> vector<8x128xf32>
      %69 = arith.index_cast %c0_i32_2 : i32 to index
      %c0_37 = arith.constant 0 : index
      %c0_38 = arith.constant 0 : index
      %70 = vector.load %arg2[%69, %c0_37, %c0_38] : memref<8x8x128xf32, #tpu.memory_space<vmem>>, vector<1x8x128xf32>
      %71 = vector.shape_cast %70 : vector<1x8x128xf32> to vector<8x128xf32>
      %72 = arith.addf %55, %71 : vector<8x128xf32>
      %73 = arith.addf %72, %68 : vector<8x128xf32>
      %74 = arith.index_cast %c0_i32_2 : i32 to index
      %c0_39 = arith.constant 0 : index
      %c0_40 = arith.constant 0 : index
      %75 = vector.load %arg5[%74, %c0_39, %c0_40] : memref<8x8x128xf32, #tpu.memory_space<vmem>>, vector<1x8x128xf32>
      %76 = vector.shape_cast %75 : vector<1x8x128xf32> to vector<8x128xf32>
      %77 = vector.shape_cast %61 : vector<8x128xf32> to vector<1x8x128xf32>
      tpu.vector_store %arg5[%74, %c0_39, %c0_40], %77 {strides = array<i32>} : memref<8x8x128xf32, #tpu.memory_space<vmem>>, vector<1x8x128xf32>,
      %c0_41 = arith.constant 0 : index
      %c0_42 = arith.constant 0 : index
      %78 = vector.load %arg6[%c0_41, %c0_42] : memref<8x384xf32, #tpu.memory_space<vmem>>, vector<8x128xf32>
      tpu.vector_store %arg6[%c0_41, %c0_42], %61 {strides = array<i32>} : memref<8x384xf32, #tpu.memory_space<vmem>>, vector<8x128xf32>,
      %c0_43 = arith.constant 0 : index
      %c128_44 = arith.constant 128 : index
      %79 = vector.load %arg6[%c0_43, %c128_44] : memref<8x384xf32, #tpu.memory_space<vmem>>, vector<8x128xf32>
      tpu.vector_store %arg6[%c0_43, %c128_44], %67 {strides = array<i32>} : memref<8x384xf32, #tpu.memory_space<vmem>>, vector<8x128xf32>,
      %c0_45 = arith.constant 0 : index
      %c256_46 = arith.constant 256 : index
      %80 = vector.load %arg6[%c0_45, %c256_46] : memref<8x384xf32, #tpu.memory_space<vmem>>, vector<8x128xf32>
      tpu.vector_store %arg6[%c0_45, %c256_46], %73 {strides = array<i32>} : memref<8x384xf32, #tpu.memory_space<vmem>>, vector<8x128xf32>,
    } else {
    }
    %c1_i32 = arith.constant 1 : i32
    %c8_i32_4 = arith.constant 8 : i32
    %9 = arith.muli %arg1, %c8_i32_4 : i32
    %10 = arith.addi %9, %c1_i32 : i32
    %c12_i32_5 = arith.constant 12 : i32
    %11 = arith.cmpi slt, %10, %c12_i32_5 : i32
    %12 = arith.extui %11 : i1 to i32
    %c0_i32_6 = arith.constant 0 : i32
    %13 = arith.cmpi ne, %12, %c0_i32_6 : i32
    scf.if %13 {
      %c0_26 = arith.constant 0 : index
      %c0_27 = arith.constant 0 : index
      %44 = vector.load %arg6[%c0_26, %c0_27] : memref<8x384xf32, #tpu.memory_space<vmem>>, vector<8x128xf32>
      %c0_28 = arith.constant 0 : index
      %c128 = arith.constant 128 : index
      %45 = vector.load %arg6[%c0_28, %c128] : memref<8x384xf32, #tpu.memory_space<vmem>>, vector<8x128xf32>
      %c0_29 = arith.constant 0 : index
      %c256 = arith.constant 256 : index
      %46 = vector.load %arg6[%c0_29, %c256] : memref<8x384xf32, #tpu.memory_space<vmem>>, vector<8x128xf32>
      %cst = arith.constant 0.000000e+00 : f32
      %47 = vector.broadcast %cst : f32 to vector<8x128xf32>
      %48 = arith.subf %47, %45 : vector<8x128xf32>
      %49 = arith.addf %48, %46 : vector<8x128xf32>
      %cst_30 = arith.constant 1.000000e-01 : f32
      %50 = vector.broadcast %cst_30 : f32 to vector<8x128xf32>
      %51 = arith.mulf %50, %49 : vector<8x128xf32>
      %52 = arith.addf %45, %51 : vector<8x128xf32>
      %cst_31 = arith.constant 2.000000e-01 : f32
      %53 = vector.broadcast %cst_31 : f32 to vector<8x128xf32>
      %54 = arith.mulf %53, %46 : vector<8x128xf32>
      %55 = arith.subf %46, %54 : vector<8x128xf32>
      %cst_32 = arith.constant 1.000000e+00 : f32
      %56 = vector.broadcast %cst_32 : f32 to vector<8x128xf32>
      %57 = arith.subf %52, %56 : vector<8x128xf32>
      %cst_33 = arith.constant 0.000000e+00 : f32
      %58 = vector.broadcast %cst_33 : f32 to vector<8x128xf32>
      %59 = arith.cmpf ogt, %57, %58 : vector<8x128xf32>
      %60 = arith.extui %59 : vector<8x128xi1> to vector<8x128xi32>
      %61 = arith.sitofp %60 : vector<8x128xi32> to vector<8x128xf32>
      %cst_34 = arith.constant 1.000000e+00 : f32
      %62 = vector.broadcast %cst_34 : f32 to vector<8x128xf32>
      %63 = arith.subf %62, %61 : vector<8x128xf32>
      %64 = arith.mulf %63, %52 : vector<8x128xf32>
      %cst_35 = arith.constant 0.000000e+00 : f32
      %65 = vector.broadcast %cst_35 : f32 to vector<8x128xf32>
      %66 = arith.mulf %61, %65 : vector<8x128xf32>
      %67 = arith.addf %64, %66 : vector<8x128xf32>
      %cst_36 = arith.constant dense<0.000000e+00> : vector<8x128xf32>
      %68 = tpu.matmul %44, %3, %cst_36 {dimension_numbers = #tpu.dot_dimension_numbers<[1], [0], [0], [1], [0, 0, 1, 1], [], []>} : vector<8x128xf32>, vector<128x128xf32>, vector<8x128xf32> -> vector<8x128xf32>
      %69 = arith.index_cast %c1_i32 : i32 to index
      %c0_37 = arith.constant 0 : index
      %c0_38 = arith.constant 0 : index
      %70 = vector.load %arg2[%69, %c0_37, %c0_38] : memref<8x8x128xf32, #tpu.memory_space<vmem>>, vector<1x8x128xf32>
      %71 = vector.shape_cast %70 : vector<1x8x128xf32> to vector<8x128xf32>
      %72 = arith.addf %55, %71 : vector<8x128xf32>
      %73 = arith.addf %72, %68 : vector<8x128xf32>
      %74 = arith.index_cast %c1_i32 : i32 to index
      %c0_39 = arith.constant 0 : index
      %c0_40 = arith.constant 0 : index
      %75 = vector.load %arg5[%74, %c0_39, %c0_40] : memref<8x8x128xf32, #tpu.memory_space<vmem>>, vector<1x8x128xf32>
      %76 = vector.shape_cast %75 : vector<1x8x128xf32> to vector<8x128xf32>
      %77 = vector.shape_cast %61 : vector<8x128xf32> to vector<1x8x128xf32>
      tpu.vector_store %arg5[%74, %c0_39, %c0_40], %77 {strides = array<i32>} : memref<8x8x128xf32, #tpu.memory_space<vmem>>, vector<1x8x128xf32>,
      %c0_41 = arith.constant 0 : index
      %c0_42 = arith.constant 0 : index
      %78 = vector.load %arg6[%c0_41, %c0_42] : memref<8x384xf32, #tpu.memory_space<vmem>>, vector<8x128xf32>
      tpu.vector_store %arg6[%c0_41, %c0_42], %61 {strides = array<i32>} : memref<8x384xf32, #tpu.memory_space<vmem>>, vector<8x128xf32>,
      %c0_43 = arith.constant 0 : index
      %c128_44 = arith.constant 128 : index
      %79 = vector.load %arg6[%c0_43, %c128_44] : memref<8x384xf32, #tpu.memory_space<vmem>>, vector<8x128xf32>
      tpu.vector_store %arg6[%c0_43, %c128_44], %67 {strides = array<i32>} : memref<8x384xf32, #tpu.memory_space<vmem>>, vector<8x128xf32>,
      %c0_45 = arith.constant 0 : index
      %c256_46 = arith.constant 256 : index
      %80 = vector.load %arg6[%c0_45, %c256_46] : memref<8x384xf32, #tpu.memory_space<vmem>>, vector<8x128xf32>
      tpu.vector_store %arg6[%c0_45, %c256_46], %73 {strides = array<i32>} : memref<8x384xf32, #tpu.memory_space<vmem>>, vector<8x128xf32>,
    } else {
    }
    %c2_i32 = arith.constant 2 : i32
    %c8_i32_7 = arith.constant 8 : i32
    %14 = arith.muli %arg1, %c8_i32_7 : i32
    %15 = arith.addi %14, %c2_i32 : i32
    %c12_i32_8 = arith.constant 12 : i32
    %16 = arith.cmpi slt, %15, %c12_i32_8 : i32
    %17 = arith.extui %16 : i1 to i32
    %c0_i32_9 = arith.constant 0 : i32
    %18 = arith.cmpi ne, %17, %c0_i32_9 : i32
    scf.if %18 {
      %c0_26 = arith.constant 0 : index
      %c0_27 = arith.constant 0 : index
      %44 = vector.load %arg6[%c0_26, %c0_27] : memref<8x384xf32, #tpu.memory_space<vmem>>, vector<8x128xf32>
      %c0_28 = arith.constant 0 : index
      %c128 = arith.constant 128 : index
      %45 = vector.load %arg6[%c0_28, %c128] : memref<8x384xf32, #tpu.memory_space<vmem>>, vector<8x128xf32>
      %c0_29 = arith.constant 0 : index
      %c256 = arith.constant 256 : index
      %46 = vector.load %arg6[%c0_29, %c256] : memref<8x384xf32, #tpu.memory_space<vmem>>, vector<8x128xf32>
      %cst = arith.constant 0.000000e+00 : f32
      %47 = vector.broadcast %cst : f32 to vector<8x128xf32>
      %48 = arith.subf %47, %45 : vector<8x128xf32>
      %49 = arith.addf %48, %46 : vector<8x128xf32>
      %cst_30 = arith.constant 1.000000e-01 : f32
      %50 = vector.broadcast %cst_30 : f32 to vector<8x128xf32>
      %51 = arith.mulf %50, %49 : vector<8x128xf32>
      %52 = arith.addf %45, %51 : vector<8x128xf32>
      %cst_31 = arith.constant 2.000000e-01 : f32
      %53 = vector.broadcast %cst_31 : f32 to vector<8x128xf32>
      %54 = arith.mulf %53, %46 : vector<8x128xf32>
      %55 = arith.subf %46, %54 : vector<8x128xf32>
      %cst_32 = arith.constant 1.000000e+00 : f32
      %56 = vector.broadcast %cst_32 : f32 to vector<8x128xf32>
      %57 = arith.subf %52, %56 : vector<8x128xf32>
      %cst_33 = arith.constant 0.000000e+00 : f32
      %58 = vector.broadcast %cst_33 : f32 to vector<8x128xf32>
      %59 = arith.cmpf ogt, %57, %58 : vector<8x128xf32>
      %60 = arith.extui %59 : vector<8x128xi1> to vector<8x128xi32>
      %61 = arith.sitofp %60 : vector<8x128xi32> to vector<8x128xf32>
      %cst_34 = arith.constant 1.000000e+00 : f32
      %62 = vector.broadcast %cst_34 : f32 to vector<8x128xf32>
      %63 = arith.subf %62, %61 : vector<8x128xf32>
      %64 = arith.mulf %63, %52 : vector<8x128xf32>
      %cst_35 = arith.constant 0.000000e+00 : f32
      %65 = vector.broadcast %cst_35 : f32 to vector<8x128xf32>
      %66 = arith.mulf %61, %65 : vector<8x128xf32>
      %67 = arith.addf %64, %66 : vector<8x128xf32>
      %cst_36 = arith.constant dense<0.000000e+00> : vector<8x128xf32>
      %68 = tpu.matmul %44, %3, %cst_36 {dimension_numbers = #tpu.dot_dimension_numbers<[1], [0], [0], [1], [0, 0, 1, 1], [], []>} : vector<8x128xf32>, vector<128x128xf32>, vector<8x128xf32> -> vector<8x128xf32>
      %69 = arith.index_cast %c2_i32 : i32 to index
      %c0_37 = arith.constant 0 : index
      %c0_38 = arith.constant 0 : index
      %70 = vector.load %arg2[%69, %c0_37, %c0_38] : memref<8x8x128xf32, #tpu.memory_space<vmem>>, vector<1x8x128xf32>
      %71 = vector.shape_cast %70 : vector<1x8x128xf32> to vector<8x128xf32>
      %72 = arith.addf %55, %71 : vector<8x128xf32>
      %73 = arith.addf %72, %68 : vector<8x128xf32>
      %74 = arith.index_cast %c2_i32 : i32 to index
      %c0_39 = arith.constant 0 : index
      %c0_40 = arith.constant 0 : index
      %75 = vector.load %arg5[%74, %c0_39, %c0_40] : memref<8x8x128xf32, #tpu.memory_space<vmem>>, vector<1x8x128xf32>
      %76 = vector.shape_cast %75 : vector<1x8x128xf32> to vector<8x128xf32>
      %77 = vector.shape_cast %61 : vector<8x128xf32> to vector<1x8x128xf32>
      tpu.vector_store %arg5[%74, %c0_39, %c0_40], %77 {strides = array<i32>} : memref<8x8x128xf32, #tpu.memory_space<vmem>>, vector<1x8x128xf32>,
      %c0_41 = arith.constant 0 : index
      %c0_42 = arith.constant 0 : index
      %78 = vector.load %arg6[%c0_41, %c0_42] : memref<8x384xf32, #tpu.memory_space<vmem>>, vector<8x128xf32>
      tpu.vector_store %arg6[%c0_41, %c0_42], %61 {strides = array<i32>} : memref<8x384xf32, #tpu.memory_space<vmem>>, vector<8x128xf32>,
      %c0_43 = arith.constant 0 : index
      %c128_44 = arith.constant 128 : index
      %79 = vector.load %arg6[%c0_43, %c128_44] : memref<8x384xf32, #tpu.memory_space<vmem>>, vector<8x128xf32>
      tpu.vector_store %arg6[%c0_43, %c128_44], %67 {strides = array<i32>} : memref<8x384xf32, #tpu.memory_space<vmem>>, vector<8x128xf32>,
      %c0_45 = arith.constant 0 : index
      %c256_46 = arith.constant 256 : index
      %80 = vector.load %arg6[%c0_45, %c256_46] : memref<8x384xf32, #tpu.memory_space<vmem>>, vector<8x128xf32>
      tpu.vector_store %arg6[%c0_45, %c256_46], %73 {strides = array<i32>} : memref<8x384xf32, #tpu.memory_space<vmem>>, vector<8x128xf32>,
    } else {
    }
    %c3_i32 = arith.constant 3 : i32
    %c8_i32_10 = arith.constant 8 : i32
    %19 = arith.muli %arg1, %c8_i32_10 : i32
    %20 = arith.addi %19, %c3_i32 : i32
    %c12_i32_11 = arith.constant 12 : i32
    %21 = arith.cmpi slt, %20, %c12_i32_11 : i32
    %22 = arith.extui %21 : i1 to i32
    %c0_i32_12 = arith.constant 0 : i32
    %23 = arith.cmpi ne, %22, %c0_i32_12 : i32
    scf.if %23 {
      %c0_26 = arith.constant 0 : index
      %c0_27 = arith.constant 0 : index
      %44 = vector.load %arg6[%c0_26, %c0_27] : memref<8x384xf32, #tpu.memory_space<vmem>>, vector<8x128xf32>
      %c0_28 = arith.constant 0 : index
      %c128 = arith.constant 128 : index
      %45 = vector.load %arg6[%c0_28, %c128] : memref<8x384xf32, #tpu.memory_space<vmem>>, vector<8x128xf32>
      %c0_29 = arith.constant 0 : index
      %c256 = arith.constant 256 : index
      %46 = vector.load %arg6[%c0_29, %c256] : memref<8x384xf32, #tpu.memory_space<vmem>>, vector<8x128xf32>
      %cst = arith.constant 0.000000e+00 : f32
      %47 = vector.broadcast %cst : f32 to vector<8x128xf32>
      %48 = arith.subf %47, %45 : vector<8x128xf32>
      %49 = arith.addf %48, %46 : vector<8x128xf32>
      %cst_30 = arith.constant 1.000000e-01 : f32
      %50 = vector.broadcast %cst_30 : f32 to vector<8x128xf32>
      %51 = arith.mulf %50, %49 : vector<8x128xf32>
      %52 = arith.addf %45, %51 : vector<8x128xf32>
      %cst_31 = arith.constant 2.000000e-01 : f32
      %53 = vector.broadcast %cst_31 : f32 to vector<8x128xf32>
      %54 = arith.mulf %53, %46 : vector<8x128xf32>
      %55 = arith.subf %46, %54 : vector<8x128xf32>
      %cst_32 = arith.constant 1.000000e+00 : f32
      %56 = vector.broadcast %cst_32 : f32 to vector<8x128xf32>
      %57 = arith.subf %52, %56 : vector<8x128xf32>
      %cst_33 = arith.constant 0.000000e+00 : f32
      %58 = vector.broadcast %cst_33 : f32 to vector<8x128xf32>
      %59 = arith.cmpf ogt, %57, %58 : vector<8x128xf32>
      %60 = arith.extui %59 : vector<8x128xi1> to vector<8x128xi32>
      %61 = arith.sitofp %60 : vector<8x128xi32> to vector<8x128xf32>
      %cst_34 = arith.constant 1.000000e+00 : f32
      %62 = vector.broadcast %cst_34 : f32 to vector<8x128xf32>
      %63 = arith.subf %62, %61 : vector<8x128xf32>
      %64 = arith.mulf %63, %52 : vector<8x128xf32>
      %cst_35 = arith.constant 0.000000e+00 : f32
      %65 = vector.broadcast %cst_35 : f32 to vector<8x128xf32>
      %66 = arith.mulf %61, %65 : vector<8x128xf32>
      %67 = arith.addf %64, %66 : vector<8x128xf32>
      %cst_36 = arith.constant dense<0.000000e+00> : vector<8x128xf32>
      %68 = tpu.matmul %44, %3, %cst_36 {dimension_numbers = #tpu.dot_dimension_numbers<[1], [0], [0], [1], [0, 0, 1, 1], [], []>} : vector<8x128xf32>, vector<128x128xf32>, vector<8x128xf32> -> vector<8x128xf32>
      %69 = arith.index_cast %c3_i32 : i32 to index
      %c0_37 = arith.constant 0 : index
      %c0_38 = arith.constant 0 : index
      %70 = vector.load %arg2[%69, %c0_37, %c0_38] : memref<8x8x128xf32, #tpu.memory_space<vmem>>, vector<1x8x128xf32>
      %71 = vector.shape_cast %70 : vector<1x8x128xf32> to vector<8x128xf32>
      %72 = arith.addf %55, %71 : vector<8x128xf32>
      %73 = arith.addf %72, %68 : vector<8x128xf32>
      %74 = arith.index_cast %c3_i32 : i32 to index
      %c0_39 = arith.constant 0 : index
      %c0_40 = arith.constant 0 : index
      %75 = vector.load %arg5[%74, %c0_39, %c0_40] : memref<8x8x128xf32, #tpu.memory_space<vmem>>, vector<1x8x128xf32>
      %76 = vector.shape_cast %75 : vector<1x8x128xf32> to vector<8x128xf32>
      %77 = vector.shape_cast %61 : vector<8x128xf32> to vector<1x8x128xf32>
      tpu.vector_store %arg5[%74, %c0_39, %c0_40], %77 {strides = array<i32>} : memref<8x8x128xf32, #tpu.memory_space<vmem>>, vector<1x8x128xf32>,
      %c0_41 = arith.constant 0 : index
      %c0_42 = arith.constant 0 : index
      %78 = vector.load %arg6[%c0_41, %c0_42] : memref<8x384xf32, #tpu.memory_space<vmem>>, vector<8x128xf32>
      tpu.vector_store %arg6[%c0_41, %c0_42], %61 {strides = array<i32>} : memref<8x384xf32, #tpu.memory_space<vmem>>, vector<8x128xf32>,
      %c0_43 = arith.constant 0 : index
      %c128_44 = arith.constant 128 : index
      %79 = vector.load %arg6[%c0_43, %c128_44] : memref<8x384xf32, #tpu.memory_space<vmem>>, vector<8x128xf32>
      tpu.vector_store %arg6[%c0_43, %c128_44], %67 {strides = array<i32>} : memref<8x384xf32, #tpu.memory_space<vmem>>, vector<8x128xf32>,
      %c0_45 = arith.constant 0 : index
      %c256_46 = arith.constant 256 : index
      %80 = vector.load %arg6[%c0_45, %c256_46] : memref<8x384xf32, #tpu.memory_space<vmem>>, vector<8x128xf32>
      tpu.vector_store %arg6[%c0_45, %c256_46], %73 {strides = array<i32>} : memref<8x384xf32, #tpu.memory_space<vmem>>, vector<8x128xf32>,
    } else {
    }
    %c4_i32 = arith.constant 4 : i32
    %c8_i32_13 = arith.constant 8 : i32
    %24 = arith.muli %arg1, %c8_i32_13 : i32
    %25 = arith.addi %24, %c4_i32 : i32
    %c12_i32_14 = arith.constant 12 : i32
    %26 = arith.cmpi slt, %25, %c12_i32_14 : i32
    %27 = arith.extui %26 : i1 to i32
    %c0_i32_15 = arith.constant 0 : i32
    %28 = arith.cmpi ne, %27, %c0_i32_15 : i32
    scf.if %28 {
      %c0_26 = arith.constant 0 : index
      %c0_27 = arith.constant 0 : index
      %44 = vector.load %arg6[%c0_26, %c0_27] : memref<8x384xf32, #tpu.memory_space<vmem>>, vector<8x128xf32>
      %c0_28 = arith.constant 0 : index
      %c128 = arith.constant 128 : index
      %45 = vector.load %arg6[%c0_28, %c128] : memref<8x384xf32, #tpu.memory_space<vmem>>, vector<8x128xf32>
      %c0_29 = arith.constant 0 : index
      %c256 = arith.constant 256 : index
      %46 = vector.load %arg6[%c0_29, %c256] : memref<8x384xf32, #tpu.memory_space<vmem>>, vector<8x128xf32>
      %cst = arith.constant 0.000000e+00 : f32
      %47 = vector.broadcast %cst : f32 to vector<8x128xf32>
      %48 = arith.subf %47, %45 : vector<8x128xf32>
      %49 = arith.addf %48, %46 : vector<8x128xf32>
      %cst_30 = arith.constant 1.000000e-01 : f32
      %50 = vector.broadcast %cst_30 : f32 to vector<8x128xf32>
      %51 = arith.mulf %50, %49 : vector<8x128xf32>
      %52 = arith.addf %45, %51 : vector<8x128xf32>
      %cst_31 = arith.constant 2.000000e-01 : f32
      %53 = vector.broadcast %cst_31 : f32 to vector<8x128xf32>
      %54 = arith.mulf %53, %46 : vector<8x128xf32>
      %55 = arith.subf %46, %54 : vector<8x128xf32>
      %cst_32 = arith.constant 1.000000e+00 : f32
      %56 = vector.broadcast %cst_32 : f32 to vector<8x128xf32>
      %57 = arith.subf %52, %56 : vector<8x128xf32>
      %cst_33 = arith.constant 0.000000e+00 : f32
      %58 = vector.broadcast %cst_33 : f32 to vector<8x128xf32>
      %59 = arith.cmpf ogt, %57, %58 : vector<8x128xf32>
      %60 = arith.extui %59 : vector<8x128xi1> to vector<8x128xi32>
      %61 = arith.sitofp %60 : vector<8x128xi32> to vector<8x128xf32>
      %cst_34 = arith.constant 1.000000e+00 : f32
      %62 = vector.broadcast %cst_34 : f32 to vector<8x128xf32>
      %63 = arith.subf %62, %61 : vector<8x128xf32>
      %64 = arith.mulf %63, %52 : vector<8x128xf32>
      %cst_35 = arith.constant 0.000000e+00 : f32
      %65 = vector.broadcast %cst_35 : f32 to vector<8x128xf32>
      %66 = arith.mulf %61, %65 : vector<8x128xf32>
      %67 = arith.addf %64, %66 : vector<8x128xf32>
      %cst_36 = arith.constant dense<0.000000e+00> : vector<8x128xf32>
      %68 = tpu.matmul %44, %3, %cst_36 {dimension_numbers = #tpu.dot_dimension_numbers<[1], [0], [0], [1], [0, 0, 1, 1], [], []>} : vector<8x128xf32>, vector<128x128xf32>, vector<8x128xf32> -> vector<8x128xf32>
      %69 = arith.index_cast %c4_i32 : i32 to index
      %c0_37 = arith.constant 0 : index
      %c0_38 = arith.constant 0 : index
      %70 = vector.load %arg2[%69, %c0_37, %c0_38] : memref<8x8x128xf32, #tpu.memory_space<vmem>>, vector<1x8x128xf32>
      %71 = vector.shape_cast %70 : vector<1x8x128xf32> to vector<8x128xf32>
      %72 = arith.addf %55, %71 : vector<8x128xf32>
      %73 = arith.addf %72, %68 : vector<8x128xf32>
      %74 = arith.index_cast %c4_i32 : i32 to index
      %c0_39 = arith.constant 0 : index
      %c0_40 = arith.constant 0 : index
      %75 = vector.load %arg5[%74, %c0_39, %c0_40] : memref<8x8x128xf32, #tpu.memory_space<vmem>>, vector<1x8x128xf32>
      %76 = vector.shape_cast %75 : vector<1x8x128xf32> to vector<8x128xf32>
      %77 = vector.shape_cast %61 : vector<8x128xf32> to vector<1x8x128xf32>
      tpu.vector_store %arg5[%74, %c0_39, %c0_40], %77 {strides = array<i32>} : memref<8x8x128xf32, #tpu.memory_space<vmem>>, vector<1x8x128xf32>,
      %c0_41 = arith.constant 0 : index
      %c0_42 = arith.constant 0 : index
      %78 = vector.load %arg6[%c0_41, %c0_42] : memref<8x384xf32, #tpu.memory_space<vmem>>, vector<8x128xf32>
      tpu.vector_store %arg6[%c0_41, %c0_42], %61 {strides = array<i32>} : memref<8x384xf32, #tpu.memory_space<vmem>>, vector<8x128xf32>,
      %c0_43 = arith.constant 0 : index
      %c128_44 = arith.constant 128 : index
      %79 = vector.load %arg6[%c0_43, %c128_44] : memref<8x384xf32, #tpu.memory_space<vmem>>, vector<8x128xf32>
      tpu.vector_store %arg6[%c0_43, %c128_44], %67 {strides = array<i32>} : memref<8x384xf32, #tpu.memory_space<vmem>>, vector<8x128xf32>,
      %c0_45 = arith.constant 0 : index
      %c256_46 = arith.constant 256 : index
      %80 = vector.load %arg6[%c0_45, %c256_46] : memref<8x384xf32, #tpu.memory_space<vmem>>, vector<8x128xf32>
      tpu.vector_store %arg6[%c0_45, %c256_46], %73 {strides = array<i32>} : memref<8x384xf32, #tpu.memory_space<vmem>>, vector<8x128xf32>,
    } else {
    }
    %c5_i32 = arith.constant 5 : i32
    %c8_i32_16 = arith.constant 8 : i32
    %29 = arith.muli %arg1, %c8_i32_16 : i32
    %30 = arith.addi %29, %c5_i32 : i32
    %c12_i32_17 = arith.constant 12 : i32
    %31 = arith.cmpi slt, %30, %c12_i32_17 : i32
    %32 = arith.extui %31 : i1 to i32
    %c0_i32_18 = arith.constant 0 : i32
    %33 = arith.cmpi ne, %32, %c0_i32_18 : i32
    scf.if %33 {
      %c0_26 = arith.constant 0 : index
      %c0_27 = arith.constant 0 : index
      %44 = vector.load %arg6[%c0_26, %c0_27] : memref<8x384xf32, #tpu.memory_space<vmem>>, vector<8x128xf32>
      %c0_28 = arith.constant 0 : index
      %c128 = arith.constant 128 : index
      %45 = vector.load %arg6[%c0_28, %c128] : memref<8x384xf32, #tpu.memory_space<vmem>>, vector<8x128xf32>
      %c0_29 = arith.constant 0 : index
      %c256 = arith.constant 256 : index
      %46 = vector.load %arg6[%c0_29, %c256] : memref<8x384xf32, #tpu.memory_space<vmem>>, vector<8x128xf32>
      %cst = arith.constant 0.000000e+00 : f32
      %47 = vector.broadcast %cst : f32 to vector<8x128xf32>
      %48 = arith.subf %47, %45 : vector<8x128xf32>
      %49 = arith.addf %48, %46 : vector<8x128xf32>
      %cst_30 = arith.constant 1.000000e-01 : f32
      %50 = vector.broadcast %cst_30 : f32 to vector<8x128xf32>
      %51 = arith.mulf %50, %49 : vector<8x128xf32>
      %52 = arith.addf %45, %51 : vector<8x128xf32>
      %cst_31 = arith.constant 2.000000e-01 : f32
      %53 = vector.broadcast %cst_31 : f32 to vector<8x128xf32>
      %54 = arith.mulf %53, %46 : vector<8x128xf32>
      %55 = arith.subf %46, %54 : vector<8x128xf32>
      %cst_32 = arith.constant 1.000000e+00 : f32
      %56 = vector.broadcast %cst_32 : f32 to vector<8x128xf32>
      %57 = arith.subf %52, %56 : vector<8x128xf32>
      %cst_33 = arith.constant 0.000000e+00 : f32
      %58 = vector.broadcast %cst_33 : f32 to vector<8x128xf32>
      %59 = arith.cmpf ogt, %57, %58 : vector<8x128xf32>
      %60 = arith.extui %59 : vector<8x128xi1> to vector<8x128xi32>
      %61 = arith.sitofp %60 : vector<8x128xi32> to vector<8x128xf32>
      %cst_34 = arith.constant 1.000000e+00 : f32
      %62 = vector.broadcast %cst_34 : f32 to vector<8x128xf32>
      %63 = arith.subf %62, %61 : vector<8x128xf32>
      %64 = arith.mulf %63, %52 : vector<8x128xf32>
      %cst_35 = arith.constant 0.000000e+00 : f32
      %65 = vector.broadcast %cst_35 : f32 to vector<8x128xf32>
      %66 = arith.mulf %61, %65 : vector<8x128xf32>
      %67 = arith.addf %64, %66 : vector<8x128xf32>
      %cst_36 = arith.constant dense<0.000000e+00> : vector<8x128xf32>
      %68 = tpu.matmul %44, %3, %cst_36 {dimension_numbers = #tpu.dot_dimension_numbers<[1], [0], [0], [1], [0, 0, 1, 1], [], []>} : vector<8x128xf32>, vector<128x128xf32>, vector<8x128xf32> -> vector<8x128xf32>
      %69 = arith.index_cast %c5_i32 : i32 to index
      %c0_37 = arith.constant 0 : index
      %c0_38 = arith.constant 0 : index
      %70 = vector.load %arg2[%69, %c0_37, %c0_38] : memref<8x8x128xf32, #tpu.memory_space<vmem>>, vector<1x8x128xf32>
      %71 = vector.shape_cast %70 : vector<1x8x128xf32> to vector<8x128xf32>
      %72 = arith.addf %55, %71 : vector<8x128xf32>
      %73 = arith.addf %72, %68 : vector<8x128xf32>
      %74 = arith.index_cast %c5_i32 : i32 to index
      %c0_39 = arith.constant 0 : index
      %c0_40 = arith.constant 0 : index
      %75 = vector.load %arg5[%74, %c0_39, %c0_40] : memref<8x8x128xf32, #tpu.memory_space<vmem>>, vector<1x8x128xf32>
      %76 = vector.shape_cast %75 : vector<1x8x128xf32> to vector<8x128xf32>
      %77 = vector.shape_cast %61 : vector<8x128xf32> to vector<1x8x128xf32>
      tpu.vector_store %arg5[%74, %c0_39, %c0_40], %77 {strides = array<i32>} : memref<8x8x128xf32, #tpu.memory_space<vmem>>, vector<1x8x128xf32>,
      %c0_41 = arith.constant 0 : index
      %c0_42 = arith.constant 0 : index
      %78 = vector.load %arg6[%c0_41, %c0_42] : memref<8x384xf32, #tpu.memory_space<vmem>>, vector<8x128xf32>
      tpu.vector_store %arg6[%c0_41, %c0_42], %61 {strides = array<i32>} : memref<8x384xf32, #tpu.memory_space<vmem>>, vector<8x128xf32>,
      %c0_43 = arith.constant 0 : index
      %c128_44 = arith.constant 128 : index
      %79 = vector.load %arg6[%c0_43, %c128_44] : memref<8x384xf32, #tpu.memory_space<vmem>>, vector<8x128xf32>
      tpu.vector_store %arg6[%c0_43, %c128_44], %67 {strides = array<i32>} : memref<8x384xf32, #tpu.memory_space<vmem>>, vector<8x128xf32>,
      %c0_45 = arith.constant 0 : index
      %c256_46 = arith.constant 256 : index
      %80 = vector.load %arg6[%c0_45, %c256_46] : memref<8x384xf32, #tpu.memory_space<vmem>>, vector<8x128xf32>
      tpu.vector_store %arg6[%c0_45, %c256_46], %73 {strides = array<i32>} : memref<8x384xf32, #tpu.memory_space<vmem>>, vector<8x128xf32>,
    } else {
    }
    %c6_i32 = arith.constant 6 : i32
    %c8_i32_19 = arith.constant 8 : i32
    %34 = arith.muli %arg1, %c8_i32_19 : i32
    %35 = arith.addi %34, %c6_i32 : i32
    %c12_i32_20 = arith.constant 12 : i32
    %36 = arith.cmpi slt, %35, %c12_i32_20 : i32
    %37 = arith.extui %36 : i1 to i32
    %c0_i32_21 = arith.constant 0 : i32
    %38 = arith.cmpi ne, %37, %c0_i32_21 : i32
    scf.if %38 {
      %c0_26 = arith.constant 0 : index
      %c0_27 = arith.constant 0 : index
      %44 = vector.load %arg6[%c0_26, %c0_27] : memref<8x384xf32, #tpu.memory_space<vmem>>, vector<8x128xf32>
      %c0_28 = arith.constant 0 : index
      %c128 = arith.constant 128 : index
      %45 = vector.load %arg6[%c0_28, %c128] : memref<8x384xf32, #tpu.memory_space<vmem>>, vector<8x128xf32>
      %c0_29 = arith.constant 0 : index
      %c256 = arith.constant 256 : index
      %46 = vector.load %arg6[%c0_29, %c256] : memref<8x384xf32, #tpu.memory_space<vmem>>, vector<8x128xf32>
      %cst = arith.constant 0.000000e+00 : f32
      %47 = vector.broadcast %cst : f32 to vector<8x128xf32>
      %48 = arith.subf %47, %45 : vector<8x128xf32>
      %49 = arith.addf %48, %46 : vector<8x128xf32>
      %cst_30 = arith.constant 1.000000e-01 : f32
      %50 = vector.broadcast %cst_30 : f32 to vector<8x128xf32>
      %51 = arith.mulf %50, %49 : vector<8x128xf32>
      %52 = arith.addf %45, %51 : vector<8x128xf32>
      %cst_31 = arith.constant 2.000000e-01 : f32
      %53 = vector.broadcast %cst_31 : f32 to vector<8x128xf32>
      %54 = arith.mulf %53, %46 : vector<8x128xf32>
      %55 = arith.subf %46, %54 : vector<8x128xf32>
      %cst_32 = arith.constant 1.000000e+00 : f32
      %56 = vector.broadcast %cst_32 : f32 to vector<8x128xf32>
      %57 = arith.subf %52, %56 : vector<8x128xf32>
      %cst_33 = arith.constant 0.000000e+00 : f32
      %58 = vector.broadcast %cst_33 : f32 to vector<8x128xf32>
      %59 = arith.cmpf ogt, %57, %58 : vector<8x128xf32>
      %60 = arith.extui %59 : vector<8x128xi1> to vector<8x128xi32>
      %61 = arith.sitofp %60 : vector<8x128xi32> to vector<8x128xf32>
      %cst_34 = arith.constant 1.000000e+00 : f32
      %62 = vector.broadcast %cst_34 : f32 to vector<8x128xf32>
      %63 = arith.subf %62, %61 : vector<8x128xf32>
      %64 = arith.mulf %63, %52 : vector<8x128xf32>
      %cst_35 = arith.constant 0.000000e+00 : f32
      %65 = vector.broadcast %cst_35 : f32 to vector<8x128xf32>
      %66 = arith.mulf %61, %65 : vector<8x128xf32>
      %67 = arith.addf %64, %66 : vector<8x128xf32>
      %cst_36 = arith.constant dense<0.000000e+00> : vector<8x128xf32>
      %68 = tpu.matmul %44, %3, %cst_36 {dimension_numbers = #tpu.dot_dimension_numbers<[1], [0], [0], [1], [0, 0, 1, 1], [], []>} : vector<8x128xf32>, vector<128x128xf32>, vector<8x128xf32> -> vector<8x128xf32>
      %69 = arith.index_cast %c6_i32 : i32 to index
      %c0_37 = arith.constant 0 : index
      %c0_38 = arith.constant 0 : index
      %70 = vector.load %arg2[%69, %c0_37, %c0_38] : memref<8x8x128xf32, #tpu.memory_space<vmem>>, vector<1x8x128xf32>
      %71 = vector.shape_cast %70 : vector<1x8x128xf32> to vector<8x128xf32>
      %72 = arith.addf %55, %71 : vector<8x128xf32>
      %73 = arith.addf %72, %68 : vector<8x128xf32>
      %74 = arith.index_cast %c6_i32 : i32 to index
      %c0_39 = arith.constant 0 : index
      %c0_40 = arith.constant 0 : index
      %75 = vector.load %arg5[%74, %c0_39, %c0_40] : memref<8x8x128xf32, #tpu.memory_space<vmem>>, vector<1x8x128xf32>
      %76 = vector.shape_cast %75 : vector<1x8x128xf32> to vector<8x128xf32>
      %77 = vector.shape_cast %61 : vector<8x128xf32> to vector<1x8x128xf32>
      tpu.vector_store %arg5[%74, %c0_39, %c0_40], %77 {strides = array<i32>} : memref<8x8x128xf32, #tpu.memory_space<vmem>>, vector<1x8x128xf32>,
      %c0_41 = arith.constant 0 : index
      %c0_42 = arith.constant 0 : index
      %78 = vector.load %arg6[%c0_41, %c0_42] : memref<8x384xf32, #tpu.memory_space<vmem>>, vector<8x128xf32>
      tpu.vector_store %arg6[%c0_41, %c0_42], %61 {strides = array<i32>} : memref<8x384xf32, #tpu.memory_space<vmem>>, vector<8x128xf32>,
      %c0_43 = arith.constant 0 : index
      %c128_44 = arith.constant 128 : index
      %79 = vector.load %arg6[%c0_43, %c128_44] : memref<8x384xf32, #tpu.memory_space<vmem>>, vector<8x128xf32>
      tpu.vector_store %arg6[%c0_43, %c128_44], %67 {strides = array<i32>} : memref<8x384xf32, #tpu.memory_space<vmem>>, vector<8x128xf32>,
      %c0_45 = arith.constant 0 : index
      %c256_46 = arith.constant 256 : index
      %80 = vector.load %arg6[%c0_45, %c256_46] : memref<8x384xf32, #tpu.memory_space<vmem>>, vector<8x128xf32>
      tpu.vector_store %arg6[%c0_45, %c256_46], %73 {strides = array<i32>} : memref<8x384xf32, #tpu.memory_space<vmem>>, vector<8x128xf32>,
    } else {
    }
    %c7_i32 = arith.constant 7 : i32
    %c8_i32_22 = arith.constant 8 : i32
    %39 = arith.muli %arg1, %c8_i32_22 : i32
    %40 = arith.addi %39, %c7_i32 : i32
    %c12_i32_23 = arith.constant 12 : i32
    %41 = arith.cmpi slt, %40, %c12_i32_23 : i32
    %42 = arith.extui %41 : i1 to i32
    %c0_i32_24 = arith.constant 0 : i32
    %43 = arith.cmpi ne, %42, %c0_i32_24 : i32
    scf.if %43 {
      %c0_26 = arith.constant 0 : index
      %c0_27 = arith.constant 0 : index
      %44 = vector.load %arg6[%c0_26, %c0_27] : memref<8x384xf32, #tpu.memory_space<vmem>>, vector<8x128xf32>
      %c0_28 = arith.constant 0 : index
      %c128 = arith.constant 128 : index
      %45 = vector.load %arg6[%c0_28, %c128] : memref<8x384xf32, #tpu.memory_space<vmem>>, vector<8x128xf32>
      %c0_29 = arith.constant 0 : index
      %c256 = arith.constant 256 : index
      %46 = vector.load %arg6[%c0_29, %c256] : memref<8x384xf32, #tpu.memory_space<vmem>>, vector<8x128xf32>
      %cst = arith.constant 0.000000e+00 : f32
      %47 = vector.broadcast %cst : f32 to vector<8x128xf32>
      %48 = arith.subf %47, %45 : vector<8x128xf32>
      %49 = arith.addf %48, %46 : vector<8x128xf32>
      %cst_30 = arith.constant 1.000000e-01 : f32
      %50 = vector.broadcast %cst_30 : f32 to vector<8x128xf32>
      %51 = arith.mulf %50, %49 : vector<8x128xf32>
      %52 = arith.addf %45, %51 : vector<8x128xf32>
      %cst_31 = arith.constant 2.000000e-01 : f32
      %53 = vector.broadcast %cst_31 : f32 to vector<8x128xf32>
      %54 = arith.mulf %53, %46 : vector<8x128xf32>
      %55 = arith.subf %46, %54 : vector<8x128xf32>
      %cst_32 = arith.constant 1.000000e+00 : f32
      %56 = vector.broadcast %cst_32 : f32 to vector<8x128xf32>
      %57 = arith.subf %52, %56 : vector<8x128xf32>
      %cst_33 = arith.constant 0.000000e+00 : f32
      %58 = vector.broadcast %cst_33 : f32 to vector<8x128xf32>
      %59 = arith.cmpf ogt, %57, %58 : vector<8x128xf32>
      %60 = arith.extui %59 : vector<8x128xi1> to vector<8x128xi32>
      %61 = arith.sitofp %60 : vector<8x128xi32> to vector<8x128xf32>
      %cst_34 = arith.constant 1.000000e+00 : f32
      %62 = vector.broadcast %cst_34 : f32 to vector<8x128xf32>
      %63 = arith.subf %62, %61 : vector<8x128xf32>
      %64 = arith.mulf %63, %52 : vector<8x128xf32>
      %cst_35 = arith.constant 0.000000e+00 : f32
      %65 = vector.broadcast %cst_35 : f32 to vector<8x128xf32>
      %66 = arith.mulf %61, %65 : vector<8x128xf32>
      %67 = arith.addf %64, %66 : vector<8x128xf32>
      %cst_36 = arith.constant dense<0.000000e+00> : vector<8x128xf32>
      %68 = tpu.matmul %44, %3, %cst_36 {dimension_numbers = #tpu.dot_dimension_numbers<[1], [0], [0], [1], [0, 0, 1, 1], [], []>} : vector<8x128xf32>, vector<128x128xf32>, vector<8x128xf32> -> vector<8x128xf32>
      %69 = arith.index_cast %c7_i32 : i32 to index
      %c0_37 = arith.constant 0 : index
      %c0_38 = arith.constant 0 : index
      %70 = vector.load %arg2[%69, %c0_37, %c0_38] : memref<8x8x128xf32, #tpu.memory_space<vmem>>, vector<1x8x128xf32>
      %71 = vector.shape_cast %70 : vector<1x8x128xf32> to vector<8x128xf32>
      %72 = arith.addf %55, %71 : vector<8x128xf32>
      %73 = arith.addf %72, %68 : vector<8x128xf32>
      %74 = arith.index_cast %c7_i32 : i32 to index
      %c0_39 = arith.constant 0 : index
      %c0_40 = arith.constant 0 : index
      %75 = vector.load %arg5[%74, %c0_39, %c0_40] : memref<8x8x128xf32, #tpu.memory_space<vmem>>, vector<1x8x128xf32>
      %76 = vector.shape_cast %75 : vector<1x8x128xf32> to vector<8x128xf32>
      %77 = vector.shape_cast %61 : vector<8x128xf32> to vector<1x8x128xf32>
      tpu.vector_store %arg5[%74, %c0_39, %c0_40], %77 {strides = array<i32>} : memref<8x8x128xf32, #tpu.memory_space<vmem>>, vector<1x8x128xf32>,
      %c0_41 = arith.constant 0 : index
      %c0_42 = arith.constant 0 : index
      %78 = vector.load %arg6[%c0_41, %c0_42] : memref<8x384xf32, #tpu.memory_space<vmem>>, vector<8x128xf32>
      tpu.vector_store %arg6[%c0_41, %c0_42], %61 {strides = array<i32>} : memref<8x384xf32, #tpu.memory_space<vmem>>, vector<8x128xf32>,
      %c0_43 = arith.constant 0 : index
      %c128_44 = arith.constant 128 : index
      %79 = vector.load %arg6[%c0_43, %c128_44] : memref<8x384xf32, #tpu.memory_space<vmem>>, vector<8x128xf32>
      tpu.vector_store %arg6[%c0_43, %c128_44], %67 {strides = array<i32>} : memref<8x384xf32, #tpu.memory_space<vmem>>, vector<8x128xf32>,
      %c0_45 = arith.constant 0 : index
      %c256_46 = arith.constant 256 : index
      %80 = vector.load %arg6[%c0_45, %c256_46] : memref<8x384xf32, #tpu.memory_space<vmem>>, vector<8x128xf32>
      tpu.vector_store %arg6[%c0_45, %c256_46], %73 {strides = array<i32>} : memref<8x384xf32, #tpu.memory_space<vmem>>, vector<8x128xf32>,
    } else {
    }
    %c8_i32_25 = arith.constant 8 : i32
    return
  }
  func.func @transform_0(%arg0: i32, %arg1: i32) -> (i32, i32, i32) {
    %c0_i32 = arith.constant 0 : i32
    %c0_i32_0 = arith.constant 0 : i32
    return %arg1, %arg0, %c0_i32 : i32, i32, i32
  }
  func.func @transform_1(%arg0: i32, %arg1: i32) -> (i32, i32) {
    %c0_i32 = arith.constant 0 : i32
    %c0_i32_0 = arith.constant 0 : i32
    return %arg0, %c0_i32 : i32, i32
  }
  func.func @transform_2(%arg0: i32, %arg1: i32) -> (i32, i32) {
    %c0_i32 = arith.constant 0 : i32
    %c0_i32_0 = arith.constant 0 : i32
    %c0_i32_1 = arith.constant 0 : i32
    return %c0_i32, %c0_i32_0 : i32, i32
  }
  func.func @transform_3(%arg0: i32, %arg1: i32) -> (i32, i32, i32) {
    %c0_i32 = arith.constant 0 : i32
    %c0_i32_0 = arith.constant 0 : i32
    return %arg1, %arg0, %c0_i32 : i32, i32, i32
  }
  func.func @transform_4(%arg0: i32, %arg1: i32) -> (i32, i32) {
    %c0_i32 = arith.constant 0 : i32
    %c0_i32_0 = arith.constant 0 : i32
    return %arg0, %c0_i32 : i32, i32
  }
}

</mosaic_0001>

<llo_original>
// kernel: lif_recurrent_sequence.1
$region0: #{lif_recurrent_sequence.1}
  #allocation0 [shape = 'u32[]', space=smem, size = 0x4, offset = 0x4, fixed_abs, tag = 'smem constant byte address 0x4 - core index']
  #allocation1 [shape = 'u32[144,128]{1,0:T(1,128)}', space=vmem, size = 0x12000, scoped, tag = 'internal scratch']
  %s0 = inlined_call_operand.vmem [shape: f32[16,8,128], index: 0, kind: input, shape index: {}]
  %s1 = inlined_call_operand.vmem [shape: f32[8,384], index: 1, kind: input, shape index: {}, may-alias: {1,4}]
  %s2 = inlined_call_operand.vmem [shape: f32[128,128], index: 2, kind: input, shape index: {}]
  %s3 = inlined_call_operand.vmem [shape: f32[16,8,128], index: 3, kind: output, shape index: {0}]
  %s4 = inlined_call_operand.vmem [shape: f32[8,384], index: 4, kind: output, shape index: {1}, may-alias: {1,4}]
  %5 = xla_tuple %s3, %s4
  %s6 = sld [smem:[#allocation0]]
  $region89: #{lif_recurrent_sequence.1} parent=0
    _
  %s8 = ssub.s32 1, %s6
  %s9 = scalar_select 0, %s8, %s6
  loop: start=0, step=1, limit=4
  $region2: #{lif_recurrent_sequence.1} parent=0 // loop_pre_header
    _
  $region3: #{lif_recurrent_sequence.1} parent=0 // loop_header
    %s11 = sphi 0, %s15
    %p12 = scmp.ge.s32.totalorder %s11, 4
    %s18 = sphi 0, %s30
    %s19 = sphi 0, %s26
    %s20 = sphi 0, %s18
    %s21 = sphi 0, %s19
    %s22 = sphi 0, %s20
    %s23 = sphi 0, %s21
    %s35 = sphi 0, %s37
    %s38 = sphi 0, %s35
    %s39 = sphi 0, %s38
    %s55 = sphi 0, %s39
    %s61 = sphi 0, %s63
    %s64 = sphi 0, %s61
    %s65 = sphi 0, %s64
    %s81 = sphi 0, %s65
    %s85 = sphi 0, %s85
    %s87 = sphi 0, %s85
    %s88 = sphi 0, %s87
    %s102 = sphi 0, %s88
    %s110 = sphi 0, %s112
    %s113 = sphi 0, %s110
    %s114 = sphi 0, %s113
    %s130 = sphi 0, %s114
    %s136 = sphi 0, %s138
    %s139 = sphi 0, %s136
    %s140 = sphi 0, %s139
    %s156 = sphi 0, %s140
  $region4: #{lif_recurrent_sequence.1} parent=0 // loop_header_branch
    %14 = sbr.rel (%p12) target = $region8
  $region5: #{lif_recurrent_sequence.1} parent=0 // loop_body
    %s16 = ssub.s32 %s11, 1
    %s17 = ssub.s32 %s11, 2
    %s24 = sadd.s32 1, %s19
    %p25 = scmp.ge.s32.totalorder %s24, 2
    %s26 = scalar_select %p25, 0, %s24
    %s27 = sadd.s32 1, %s18
    %s28 = scalar_select %p25, %s27, %s18
    %p29 = scmp.ge.s32.totalorder %s28, 1
    %s30 = scalar_select %p29, 0, %s28
    %s31 = ssub.s32 %s19, %s26
    %s32 = ssub.s32 %s18, %s30
    %s33 = sor.u32 %s31, %s32
    %p34 = scmp.eq.s32.totalorder %s33, 0
    %s36 = sadd.s32 %s35, 1
    %s37 = scalar_select %p34, %s35, %s36
    %p40 = pneg %p34
    %p41 = scmp.eq.s32.totalorder %s11, 1
    %p42 = por %p40, %p41
    %p43 = scmp.ne.s32.totalorder %s35, %s38
    %p44 = scmp.eq.s32.totalorder %s11, 0
    %p45 = por %p43, %p44
    %p46 = scmp.ne.s32.totalorder %s35, %s38
    %p47 = scmp.eq.s32.totalorder %s16, 1
    %p48 = por %p46, %p47
    %p49 = scmp.ne.s32.totalorder %s38, %s39
    %p50 = scmp.eq.s32.totalorder %s16, 0
    %p51 = por %p49, %p50
    %p52 = scmp.ne.s32.totalorder %s38, %s39
    %p53 = scmp.eq.s32.totalorder %s17, 1
    %p54 = por %p52, %p53
    %p56 = scmp.ne.s32.totalorder %s39, %s55
    %p57 = scmp.eq.s32.totalorder %s17, 0
    %p58 = por %p56, %p57
    %s59 = ssub.s32 %s18, %s30
    %p60 = scmp.eq.s32.totalorder %s59, 0
    %s62 = sadd.s32 %s61, 1
    %s63 = scalar_select %p60, %s61, %s62
    %p66 = pneg %p60
    %p67 = scmp.eq.s32.totalorder %s11, 1
    %p68 = por %p66, %p67
    %p69 = scmp.ne.s32.totalorder %s61, %s64
    %p70 = scmp.eq.s32.totalorder %s11, 0
    %p71 = por %p69, %p70
    %p72 = scmp.ne.s32.totalorder %s61, %s64
    %p73 = scmp.eq.s32.totalorder %s16, 1
    %p74 = por %p72, %p73
    %p75 = scmp.ne.s32.totalorder %s64, %s65
    %p76 = scmp.eq.s32.totalorder %s16, 0
    %p77 = por %p75, %p76
    %p78 = scmp.ne.s32.totalorder %s64, %s65
    %p79 = scmp.eq.s32.totalorder %s17, 1
    %p80 = por %p78, %p79
    %p82 = scmp.ne.s32.totalorder %s65, %s81
    %p83 = scmp.eq.s32.totalorder %s17, 0
    %p84 = por %p82, %p83
    %s86 = sadd.s32 %s85, 1
    %p89 = scmp.eq.s32.totalorder %s11, 1
    %p90 = scmp.ne.s32.totalorder %s85, %s87
    %p91 = scmp.eq.s32.totalorder %s11, 0
    %p92 = por %p90, %p91
    %p93 = scmp.ne.s32.totalorder %s85, %s87
    %p94 = scmp.eq.s32.totalorder %s16, 1
    %p95 = por %p93, %p94
    %p96 = scmp.ne.s32.totalorder %s87, %s88
    %p97 = scmp.eq.s32.totalorder %s16, 0
    %p98 = por %p96, %p97
    %p99 = scmp.ne.s32.totalorder %s87, %s88
    %p100 = scmp.eq.s32.totalorder %s17, 1
    %p101 = por %p99, %p100
    %p103 = scmp.ne.s32.totalorder %s88, %s102
    %p104 = scmp.eq.s32.totalorder %s17, 0
    %p105 = por %p103, %p104
    %s106 = ssub.s32 %s19, %s26
    %s107 = ssub.s32 %s18, %s30
    %s108 = sor.u32 %s106, %s107
    %p109 = scmp.eq.s32.totalorder %s108, 0
    %s111 = sadd.s32 %s110, 1
    %s112 = scalar_select %p109, %s110, %s111
    %p115 = pneg %p109
    %p116 = scmp.eq.s32.totalorder %s11, 1
    %p117 = por %p115, %p116
    %p118 = scmp.ne.s32.totalorder %s110, %s113
    %p119 = scmp.eq.s32.totalorder %s11, 0
    %p120 = por %p118, %p119
    %p121 = scmp.ne.s32.totalorder %s110, %s113
    %p122 = scmp.eq.s32.totalorder %s16, 1
    %p123 = por %p121, %p122
    %p124 = scmp.ne.s32.totalorder %s113, %s114
    %p125 = scmp.eq.s32.totalorder %s16, 0
    %p126 = por %p124, %p125
    %p127 = scmp.ne.s32.totalorder %s113, %s114
    %p128 = scmp.eq.s32.totalorder %s17, 1
    %p129 = por %p127, %p128
    %p131 = scmp.ne.s32.totalorder %s114, %s130
    %p132 = scmp.eq.s32.totalorder %s17, 0
    %p133 = por %p131, %p132
    %s134 = ssub.s32 %s18, %s30
    %p135 = scmp.eq.s32.totalorder %s134, 0
    %s137 = sadd.s32 %s136, 1
    %s138 = scalar_select %p135, %s136, %s137
    %p141 = pneg %p135
    %p142 = scmp.eq.s32.totalorder %s11, 1
    %p143 = por %p141, %p142
    %p144 = scmp.ne.s32.totalorder %s136, %s139
    %p145 = scmp.eq.s32.totalorder %s11, 0
    %p146 = por %p144, %p145
    %p147 = scmp.ne.s32.totalorder %s136, %s139
    %p148 = scmp.eq.s32.totalorder %s16, 1
    %p149 = por %p147, %p148
    %p150 = scmp.ne.s32.totalorder %s139, %s140
    %p151 = scmp.eq.s32.totalorder %s16, 0
    %p152 = por %p150, %p151
    %p153 = scmp.ne.s32.totalorder %s139, %s140
    %p154 = scmp.eq.s32.totalorder %s17, 1
    %p155 = por %p153, %p154
    %p157 = scmp.ne.s32.totalorder %s140, %s156
    %p158 = scmp.eq.s32.totalorder %s17, 0
    %p159 = por %p157, %p158
    %p160 = scmp.le.s32.totalorder 1, %s11
    %p161 = scmp.lt.s32.totalorder %s11, 3
    %p162 = pnand %p160, %p161
    %p163 = pneg %p162
    // Predicated region
    $region9: #{lif_recurrent_sequence.1} parent=5 // pred_check
      _
    $region10: #{lif_recurrent_sequence.1} parent=5 // pred_check_branch
      %165 = sbr.rel (%p162) target = $region12
    $region11: #{lif_recurrent_sequence.1} parent=5 // pred_region
      %s166 = ssub.s32 %s11, 1
      // Predicated region
      $region13: #{lif_recurrent_sequence.1} parent=11 // pred_check
        %p167 = pneg %p77
      $region14: #{lif_recurrent_sequence.1} parent=11 // pred_check_branch
        %169 = sbr.rel (%p167) target = $region16
      $region15: #{lif_recurrent_sequence.1} parent=11 // pred_region
        %p170 = scmp.lt.s32.totalorder %s20, 0
        %s171 = scalar_select %p170, %s20, 0
        %s172 = smul.addr %s171, 3
        %s173 = smul.addr %s172, 8
        %s174 = scalar_lea.vmem %s1, %s173
      $region16: #{lif_recurrent_sequence.1} parent=11 // pred_fallthru
        _
      // Predicated region
      $region17: #{lif_recurrent_sequence.1} parent=11 // pred_check
        %p175 = pneg %p98
      $region18: #{lif_recurrent_sequence.1} parent=11 // pred_check_branch
        %177 = sbr.rel (%p175) target = $region20
      $region19: #{lif_recurrent_sequence.1} parent=11 // pred_region
        _
      $region20: #{lif_recurrent_sequence.1} parent=11 // pred_fallthru
        _
    $region12: #{lif_recurrent_sequence.1} parent=5 // pred_fallthru
      _
    %p178 = scmp.lt.s32.totalorder %s11, 2
    // Predicated region
    $region21: #{lif_recurrent_sequence.1} parent=5 // pred_check
      %p179 = pneg %p178
    $region22: #{lif_recurrent_sequence.1} parent=5 // pred_check_branch
      %181 = sbr.rel (%p179) target = $region24
    $region23: #{lif_recurrent_sequence.1} parent=5 // pred_region
      // Predicated region
      $region25: #{lif_recurrent_sequence.1} parent=23 // pred_check
        %p182 = pneg %p45
      $region26: #{lif_recurrent_sequence.1} parent=23 // pred_check_branch
        %184 = sbr.rel (%p182) target = $region28
      $region27: #{lif_recurrent_sequence.1} parent=23 // pred_region
        %s185 = smul.u32 8, %s19
        %p186 = scmp.lt.s32.totalorder %s185, 15
        %s187 = scalar_select %p186, %s185, 15
        %p188 = scmp.lt.s32.totalorder %s18, 0
        %s189 = scalar_select %p188, %s18, 0
        %s190 = sadd.s32 %s189, %s187
        %s191 = smul.addr %s190, 8
        %s192 = scalar_lea.vmem %s0, %s191
        %s193 = smul.u32 8, %s19
      $region28: #{lif_recurrent_sequence.1} parent=23 // pred_fallthru
        _
    $region24: #{lif_recurrent_sequence.1} parent=5 // pred_fallthru
      _
    %p194 = scmp.le.s32.totalorder 1, %s11
    %p195 = scmp.lt.s32.totalorder %s11, 3
    %p196 = pnand %p194, %p195
    %p197 = pneg %p196
    // Predicated region
    $region29: #{lif_recurrent_sequence.1} parent=5 // pred_check
      _
    $region30: #{lif_recurrent_sequence.1} parent=5 // pred_check_branch
      %199 = sbr.rel (%p196) target = $region32
    $region31: #{lif_recurrent_sequence.1} parent=5 // pred_region
      %s200 = ssub.s32 %s11, 1
      %s201 = smul.u32 8, %s21
      %p202 = scmp.lt.s32.totalorder %s201, 15
      %s203 = scalar_select %p202, %s201, 15
      %p204 = scmp.lt.s32.totalorder %s20, 0
      %s205 = scalar_select %p204, %s20, 0
      %s206 = sadd.s32 %s205, %s203
      %s207 = smul.addr %s206, 8
      %s208 = scalar_lea.vmem %s0, %s207
      %p209 = pneg %p51
      %p210 = pneg %p48
      %p211 = scmp.lt.s32.totalorder %s20, 0
      %s212 = scalar_select %p211, %s20, 0
      %s213 = smul.addr %s212, 3
      %s214 = smul.addr %s213, 8
      %s215 = scalar_lea.vmem %s1, %s214
      %p216 = pneg %p77
      %p217 = pneg %p74
      %p218 = pneg %p98
      %p219 = pneg %p95
      %p220 = pneg %p126
      %p221 = pneg %p123
      %s222 = smul.u32 8, %s21
      %p223 = scmp.lt.s32.totalorder %s222, 15
      %s224 = scalar_select %p223, %s222, 15
      %p225 = scmp.lt.s32.totalorder %s20, 0
      %s226 = scalar_select %p225, %s20, 0
      %s227 = sadd.s32 %s226, %s224
      %s228 = smul.addr %s227, 8
      %s229 = scalar_lea.vmem %s3, %s228
      %p230 = pneg %p152
      %p231 = pneg %p149
      %p232 = scmp.lt.s32.totalorder %s20, 0
      %s233 = scalar_select %p232, %s20, 0
      %s234 = smul.addr %s233, 3
      %s235 = smul.addr %s234, 8
      %s236 = scalar_lea.vmem %s4, %s235
      %s237 = smul.u32 8, %s21
      %p238 = scmp.lt.s32.totalorder %s237, 15
      %s239 = scalar_select %p238, %s237, 15
      %p240 = scmp.lt.s32.totalorder %s20, 0
      %s241 = scalar_select %p240, %s20, 0
      %s242 = sadd.s32 %s241, %s239
      %s243 = smul.addr %s242, 8
      %s244 = scalar_lea.vmem %s0, %s243
      %s245 = smul.u32 8, %s21
      %p246 = scmp.lt.s32.totalorder %s20, 0
      %s247 = scalar_select %p246, %s20, 0
      %s248 = smul.addr %s247, 3
      %s249 = smul.addr %s248, 8
      %s250 = scalar_lea.vmem %s1, %s249
      %s251 = smul.u32 8, %s21
      %p252 = scmp.lt.s32.totalorder %s251, 15
      %s253 = scalar_select %p252, %s251, 15
      %p254 = scmp.lt.s32.totalorder %s20, 0
      %s255 = scalar_select %p254, %s20, 0
      %s256 = sadd.s32 %s255, %s253
      %s257 = smul.addr %s256, 8
      %s258 = scalar_lea.vmem %s3, %s257
      %s259 = smul.u32 8, %s21
      %p260 = scmp.lt.s32.totalorder %s20, 0
      %s261 = scalar_select %p260, %s20, 0
      %s262 = smul.addr %s261, 3
      %s263 = smul.addr %s262, 8
      %s264 = scalar_lea.vmem %s4, %s263
      %p265 = scmp.eq.s32.totalorder %s21, 0
      // Predicated region
      $region33: #{lif_recurrent_sequence.1} parent=31 // pred_check
        %p266 = pneg %p265
      $region34: #{lif_recurrent_sequence.1} parent=31 // pred_check_branch
        %268 = sbr.rel (%p266) target = $region36
      $region35: #{lif_recurrent_sequence.1} parent=31 // pred_region
        %v269 = vld [vmem:[%s250] sm:$0xff]
        %v270 = vld [vmem:[%s250 + $0x8] sm:$0xff]
        %v271 = vld [vmem:[%s250 + $0x10] sm:$0xff]
        %272 = vst [vmem:[%s264] sm:$0xff] %v269
        %273 = vst [vmem:[%s264 + $0x8] sm:$0xff] %v270
        %274 = vst [vmem:[%s264 + $0x10] sm:$0xff] %v271
      $region36: #{lif_recurrent_sequence.1} parent=31 // pred_fallthru
        _
      %v275 = vld [vmem:[%s2] sm:$0xff]
      %v276 = vld [vmem:[%s2 + $0x8] sm:$0xff]
      %v277 = vld [vmem:[%s2 + $0x10] sm:$0xff]
      %v278 = vld [vmem:[%s2 + $0x18] sm:$0xff]
      %v279 = vld [vmem:[%s2 + $0x20] sm:$0xff]
      %v280 = vld [vmem:[%s2 + $0x28] sm:$0xff]
      %v281 = vld [vmem:[%s2 + $0x30] sm:$0xff]
      %v282 = vld [vmem:[%s2 + $0x38] sm:$0xff]
      %v283 = vld [vmem:[%s2 + $0x40] sm:$0xff]
      %v284 = vld [vmem:[%s2 + $0x48] sm:$0xff]
      %v285 = vld [vmem:[%s2 + $0x50] sm:$0xff]
      %v286 = vld [vmem:[%s2 + $0x58] sm:$0xff]
      %v287 = vld [vmem:[%s2 + $0x60] sm:$0xff]
      %v288 = vld [vmem:[%s2 + $0x68] sm:$0xff]
      %v289 = vld [vmem:[%s2 + $0x70] sm:$0xff]
      %v290 = vld [vmem:[%s2 + $0x78] sm:$0xff]
      %s291 = smul.u32 %s21, 8
      %p292 = scmp.lt.s32.totalorder %s291, 12
      // Predicated region
      $region37: #{lif_recurrent_sequence.1} parent=31 // pred_check
        %p293 = pneg %p292
      $region38: #{lif_recurrent_sequence.1} parent=31 // pred_check_branch
        %295 = sbr.rel (%p293) target = $region40
      $region39: #{lif_recurrent_sequence.1} parent=31 // pred_region
        %v296 = vld [vmem:[%s264] sm:$0xff]
        %v297 = vld [vmem:[%s264 + $0x8] sm:$0xff]
        %v298 = vld [vmem:[%s264 + $0x10] sm:$0xff]
        %v299 = vsub.f32 0.0, %v297
        %v300 = vadd.f32 %v299, %v298
        %v301 = vmul.f32 %v300, 0.1
        %v302 = vadd.f32 %v297, %v301
        %v303 = vmul.f32 %v298, 0.2
        %v304 = vsub.f32 %v298, %v303
        %v305 = vsub.f32 %v302, 1.0
        %vm306 = vcmp.gt.f32.partialorder %v305, 0.0
        %v307 = vsel %vm306, 1, 0
        %v308 = vcvt.s32.f32 %v307
        %v309 = vsub.f32 1.0, %v308
        %v310 = vmul.f32 %v309, %v302
        %v311 = vmul.f32 %v308, 0.0
        %v312 = vadd.f32 %v310, %v311
        %313 = vmatprep.subr.mxu0 0.0
        %314 = vmatpush1.msra.mxu0 %v275
        %315 = vmatprep.subr.mxu0 0.0
        %316 = vmatpush1.msra.mxu0 %v276
        %317 = vmatprep.subr.mxu0 0.0
        %318 = vmatpush1.msra.mxu0 %v277
        %319 = vmatprep.subr.mxu0 0.0
        %320 = vmatpush1.msra.mxu0 %v278
        %321 = vmatprep.subr.mxu0 0.0
        %322 = vmatpush1.msra.mxu0 %v279
        %323 = vmatprep.subr.mxu0 0.0
        %324 = vmatpush1.msra.mxu0 %v280
        %325 = vmatprep.subr.mxu0 0.0
        %326 = vmatpush1.msra.mxu0 %v281
        %327 = vmatprep.subr.mxu0 0.0
        %328 = vmatpush1.msra.mxu0 %v282
        %329 = vmatprep.subr.mxu0 0.0
        %330 = vmatpush1.msra.mxu0 %v283
        %331 = vmatprep.subr.mxu0 0.0
        %332 = vmatpush1.msra.mxu0 %v284
        %333 = vmatprep.subr.mxu0 0.0
        %334 = vmatpush1.msra.mxu0 %v285
        %335 = vmatprep.subr.mxu0 0.0
        %336 = vmatpush1.msra.mxu0 %v286
        %337 = vmatprep.subr.mxu0 0.0
        %338 = vmatpush1.msra.mxu0 %v287
        %339 = vmatprep.subr.mxu0 0.0
        %340 = vmatpush1.msra.mxu0 %v288
        %341 = vmatprep.subr.mxu0 0.0
        %342 = vmatpush1.msra.mxu0 %v289
        %343 = vmatprep.subr.mxu0 0.0
        %344 = vmatpush1.msra.mxu0 %v290
        %345 = vmatprep.subr.mxu0 0.0
        %346 = vmatpush1.msra.mxu0 0.0
        %347 = vmatprep.subr.mxu0 0.0
        %348 = vmatpush1.msra.mxu0 0.0
        %349 = vmatprep.subr.mxu0 0.0
        %350 = vmatpush1.msra.mxu0 0.0
        %351 = vmatprep.subr.mxu0 0.0
        %352 = vmatpush1.msra.mxu0 0.0
        %353 = vmatprep.subr.mxu0 0.0
        %354 = vmatpush1.msra.mxu0 0.0
        %355 = vmatprep.subr.mxu0 0.0
        %356 = vmatpush1.msra.mxu0 0.0
        %357 = vmatprep.subr.mxu0 0.0
        %358 = vmatpush1.msra.mxu0 0.0
        %359 = vmatprep.subr.mxu0 0.0
        %360 = vmatpush1.msra.mxu0 0.0
        %361 = vmatprep.subr.mxu0 0.0
        %362 = vmatpush1.msra.mxu0 0.0
        %363 = vmatprep.subr.mxu0 0.0
        %364 = vmatpush1.msra.mxu0 0.0
        %365 = vmatprep.subr.mxu0 0.0
        %366 = vmatpush1.msra.mxu0 0.0
        %367 = vmatprep.subr.mxu0 0.0
        %368 = vmatpush1.msra.mxu0 0.0
        %369 = vmatprep.subr.mxu0 0.0
        %370 = vmatpush1.msra.mxu0 0.0
        %371 = vmatprep.subr.mxu0 0.0
        %372 = vmatpush1.msra.mxu0 0.0
        %373 = vmatprep.subr.mxu0 0.0
        %374 = vmatpush1.msra.mxu0 0.0
        %375 = vmatprep.subr.mxu0 0.0
        %376 = vmatpush1.msra.mxu0 0.0
        %377 = vmatprep.mubr.f32.mxu0 0.0
        %378 = vmatmul.mubr.f32.gmra.mrb[0].mxu0 %v296
        %v379 = vpop.f32.mrb[0].mxu0
        %v380 = vadd.f32 0.0, %v379
        %v381 = vpop.f32.mrb[0].mxu0
        %382 = vdwg.mxu0
        %v383 = vld [vmem:[%s244] sm:$0xff]
        %v384 = vadd.f32 %v304, %v383
        %v385 = vadd.f32 %v384, %v380
        %386 = vst [vmem:[%s258] sm:$0xff] %v308
        %387 = vst [vmem:[%s264] sm:$0xff] %v308
        %388 = vst [vmem:[%s264 + $0x8] sm:$0xff] %v312
        %389 = vst [vmem:[%s264 + $0x10] sm:$0xff] %v385
      $region40: #{lif_recurrent_sequence.1} parent=31 // pred_fallthru
        _
      %s390 = sadd.s32 %s291, 1
      %p391 = scmp.lt.s32.totalorder %s390, 12
      // Predicated region
      $region41: #{lif_recurrent_sequence.1} parent=31 // pred_check
        %p392 = pneg %p391
      $region42: #{lif_recurrent_sequence.1} parent=31 // pred_check_branch
        %394 = sbr.rel (%p392) target = $region44
      $region43: #{lif_recurrent_sequence.1} parent=31 // pred_region
        %v395 = vld [vmem:[%s264] sm:$0xff]
        %v396 = vld [vmem:[%s264 + $0x8] sm:$0xff]
        %v397 = vld [vmem:[%s264 + $0x10] sm:$0xff]
        %v398 = vsub.f32 0.0, %v396
        %v399 = vadd.f32 %v398, %v397
        %v400 = vmul.f32 %v399, 0.1
        %v401 = vadd.f32 %v396, %v400
        %v402 = vmul.f32 %v397, 0.2
        %v403 = vsub.f32 %v397, %v402
        %v404 = vsub.f32 %v401, 1.0
        %vm405 = vcmp.gt.f32.partialorder %v404, 0.0
        %v406 = vsel %vm405, 1, 0
        %v407 = vcvt.s32.f32 %v406
        %v408 = vsub.f32 1.0, %v407
        %v409 = vmul.f32 %v408, %v401
        %v410 = vmul.f32 %v407, 0.0
        %v411 = vadd.f32 %v409, %v410
        %412 = vmatprep.subr.mxu0 0.0
        %413 = vmatpush1.msra.mxu0 %v275
        %414 = vmatprep.subr.mxu0 0.0
        %415 = vmatpush1.msra.mxu0 %v276
        %416 = vmatprep.subr.mxu0 0.0
        %417 = vmatpush1.msra.mxu0 %v277
        %418 = vmatprep.subr.mxu0 0.0
        %419 = vmatpush1.msra.mxu0 %v278
        %420 = vmatprep.subr.mxu0 0.0
        %421 = vmatpush1.msra.mxu0 %v279
        %422 = vmatprep.subr.mxu0 0.0
        %423 = vmatpush1.msra.mxu0 %v280
        %424 = vmatprep.subr.mxu0 0.0
        %425 = vmatpush1.msra.mxu0 %v281
        %426 = vmatprep.subr.mxu0 0.0
        %427 = vmatpush1.msra.mxu0 %v282
        %428 = vmatprep.subr.mxu0 0.0
        %429 = vmatpush1.msra.mxu0 %v283
        %430 = vmatprep.subr.mxu0 0.0
        %431 = vmatpush1.msra.mxu0 %v284
        %432 = vmatprep.subr.mxu0 0.0
        %433 = vmatpush1.msra.mxu0 %v285
        %434 = vmatprep.subr.mxu0 0.0
        %435 = vmatpush1.msra.mxu0 %v286
        %436 = vmatprep.subr.mxu0 0.0
        %437 = vmatpush1.msra.mxu0 %v287
        %438 = vmatprep.subr.mxu0 0.0
        %439 = vmatpush1.msra.mxu0 %v288
        %440 = vmatprep.subr.mxu0 0.0
        %441 = vmatpush1.msra.mxu0 %v289
        %442 = vmatprep.subr.mxu0 0.0
        %443 = vmatpush1.msra.mxu0 %v290
        %444 = vmatprep.subr.mxu0 0.0
        %445 = vmatpush1.msra.mxu0 0.0
        %446 = vmatprep.subr.mxu0 0.0
        %447 = vmatpush1.msra.mxu0 0.0
        %448 = vmatprep.subr.mxu0 0.0
        %449 = vmatpush1.msra.mxu0 0.0
        %450 = vmatprep.subr.mxu0 0.0
        %451 = vmatpush1.msra.mxu0 0.0
        %452 = vmatprep.subr.mxu0 0.0
        %453 = vmatpush1.msra.mxu0 0.0
        %454 = vmatprep.subr.mxu0 0.0
        %455 = vmatpush1.msra.mxu0 0.0
        %456 = vmatprep.subr.mxu0 0.0
        %457 = vmatpush1.msra.mxu0 0.0
        %458 = vmatprep.subr.mxu0 0.0
        %459 = vmatpush1.msra.mxu0 0.0
        %460 = vmatprep.subr.mxu0 0.0
        %461 = vmatpush1.msra.mxu0 0.0
        %462 = vmatprep.subr.mxu0 0.0
        %463 = vmatpush1.msra.mxu0 0.0
        %464 = vmatprep.subr.mxu0 0.0
        %465 = vmatpush1.msra.mxu0 0.0
        %466 = vmatprep.subr.mxu0 0.0
        %467 = vmatpush1.msra.mxu0 0.0
        %468 = vmatprep.subr.mxu0 0.0
        %469 = vmatpush1.msra.mxu0 0.0
        %470 = vmatprep.subr.mxu0 0.0
        %471 = vmatpush1.msra.mxu0 0.0
        %472 = vmatprep.subr.mxu0 0.0
        %473 = vmatpush1.msra.mxu0 0.0
        %474 = vmatprep.subr.mxu0 0.0
        %475 = vmatpush1.msra.mxu0 0.0
        %476 = vmatprep.mubr.f32.mxu0 0.0
        %477 = vmatmul.mubr.f32.gmra.mrb[0].mxu0 %v395
        %v478 = vpop.f32.mrb[0].mxu0
        %v479 = vadd.f32 0.0, %v478
        %v480 = vpop.f32.mrb[0].mxu0
        %481 = vdwg.mxu0
        %s482 = scalar_lea.vmem %s244, 8
        %v483 = vld [vmem:[%s482] sm:$0xff]
        %v484 = vadd.f32 %v403, %v483
        %v485 = vadd.f32 %v484, %v479
        %s486 = scalar_lea.vmem %s258, 8
        %487 = vst [vmem:[%s486] sm:$0xff] %v407
        %488 = vst [vmem:[%s264] sm:$0xff] %v407
        %489 = vst [vmem:[%s264 + $0x8] sm:$0xff] %v411
        %490 = vst [vmem:[%s264 + $0x10] sm:$0xff] %v485
      $region44: #{lif_recurrent_sequence.1} parent=31 // pred_fallthru
        _
      %s491 = sadd.s32 %s291, 2
      %p492 = scmp.lt.s32.totalorder %s491, 12
      // Predicated region
      $region45: #{lif_recurrent_sequence.1} parent=31 // pred_check
        %p493 = pneg %p492
      $region46: #{lif_recurrent_sequence.1} parent=31 // pred_check_branch
        %495 = sbr.rel (%p493) target = $region48
      $region47: #{lif_recurrent_sequence.1} parent=31 // pred_region
        %v496 = vld [vmem:[%s264] sm:$0xff]
        %v497 = vld [vmem:[%s264 + $0x8] sm:$0xff]
        %v498 = vld [vmem:[%s264 + $0x10] sm:$0xff]
        %v499 = vsub.f32 0.0, %v497
        %v500 = vadd.f32 %v499, %v498
        %v501 = vmul.f32 %v500, 0.1
        %v502 = vadd.f32 %v497, %v501
        %v503 = vmul.f32 %v498, 0.2
        %v504 = vsub.f32 %v498, %v503
        %v505 = vsub.f32 %v502, 1.0
        %vm506 = vcmp.gt.f32.partialorder %v505, 0.0
        %v507 = vsel %vm506, 1, 0
        %v508 = vcvt.s32.f32 %v507
        %v509 = vsub.f32 1.0, %v508
        %v510 = vmul.f32 %v509, %v502
        %v511 = vmul.f32 %v508, 0.0
        %v512 = vadd.f32 %v510, %v511
        %513 = vmatprep.subr.mxu0 0.0
        %514 = vmatpush1.msra.mxu0 %v275
        %515 = vmatprep.subr.mxu0 0.0
        %516 = vmatpush1.msra.mxu0 %v276
        %517 = vmatprep.subr.mxu0 0.0
        %518 = vmatpush1.msra.mxu0 %v277
        %519 = vmatprep.subr.mxu0 0.0
        %520 = vmatpush1.msra.mxu0 %v278
        %521 = vmatprep.subr.mxu0 0.0
        %522 = vmatpush1.msra.mxu0 %v279
        %523 = vmatprep.subr.mxu0 0.0
        %524 = vmatpush1.msra.mxu0 %v280
        %525 = vmatprep.subr.mxu0 0.0
        %526 = vmatpush1.msra.mxu0 %v281
        %527 = vmatprep.subr.mxu0 0.0
        %528 = vmatpush1.msra.mxu0 %v282
        %529 = vmatprep.subr.mxu0 0.0
        %530 = vmatpush1.msra.mxu0 %v283
        %531 = vmatprep.subr.mxu0 0.0
        %532 = vmatpush1.msra.mxu0 %v284
        %533 = vmatprep.subr.mxu0 0.0
        %534 = vmatpush1.msra.mxu0 %v285
        %535 = vmatprep.subr.mxu0 0.0
        %536 = vmatpush1.msra.mxu0 %v286
        %537 = vmatprep.subr.mxu0 0.0
        %538 = vmatpush1.msra.mxu0 %v287
        %539 = vmatprep.subr.mxu0 0.0
        %540 = vmatpush1.msra.mxu0 %v288
        %541 = vmatprep.subr.mxu0 0.0
        %542 = vmatpush1.msra.mxu0 %v289
        %543 = vmatprep.subr.mxu0 0.0
        %544 = vmatpush1.msra.mxu0 %v290
        %545 = vmatprep.subr.mxu0 0.0
        %546 = vmatpush1.msra.mxu0 0.0
        %547 = vmatprep.subr.mxu0 0.0
        %548 = vmatpush1.msra.mxu0 0.0
        %549 = vmatprep.subr.mxu0 0.0
        %550 = vmatpush1.msra.mxu0 0.0
        %551 = vmatprep.subr.mxu0 0.0
        %552 = vmatpush1.msra.mxu0 0.0
        %553 = vmatprep.subr.mxu0 0.0
        %554 = vmatpush1.msra.mxu0 0.0
        %555 = vmatprep.subr.mxu0 0.0
        %556 = vmatpush1.msra.mxu0 0.0
        %557 = vmatprep.subr.mxu0 0.0
        %558 = vmatpush1.msra.mxu0 0.0
        %559 = vmatprep.subr.mxu0 0.0
        %560 = vmatpush1.msra.mxu0 0.0
        %561 = vmatprep.subr.mxu0 0.0
        %562 = vmatpush1.msra.mxu0 0.0
        %563 = vmatprep.subr.mxu0 0.0
        %564 = vmatpush1.msra.mxu0 0.0
        %565 = vmatprep.subr.mxu0 0.0
        %566 = vmatpush1.msra.mxu0 0.0
        %567 = vmatprep.subr.mxu0 0.0
        %568 = vmatpush1.msra.mxu0 0.0
        %569 = vmatprep.subr.mxu0 0.0
        %570 = vmatpush1.msra.mxu0 0.0
        %571 = vmatprep.subr.mxu0 0.0
        %572 = vmatpush1.msra.mxu0 0.0
        %573 = vmatprep.subr.mxu0 0.0
        %574 = vmatpush1.msra.mxu0 0.0
        %575 = vmatprep.subr.mxu0 0.0
        %576 = vmatpush1.msra.mxu0 0.0
        %577 = vmatprep.mubr.f32.mxu0 0.0
        %578 = vmatmul.mubr.f32.gmra.mrb[0].mxu0 %v496
        %v579 = vpop.f32.mrb[0].mxu0
        %v580 = vadd.f32 0.0, %v579
        %v581 = vpop.f32.mrb[0].mxu0
        %582 = vdwg.mxu0
        %s583 = scalar_lea.vmem %s244, 16
        %v584 = vld [vmem:[%s583] sm:$0xff]
        %v585 = vadd.f32 %v504, %v584
        %v586 = vadd.f32 %v585, %v580
        %s587 = scalar_lea.vmem %s258, 16
        %588 = vst [vmem:[%s587] sm:$0xff] %v508
        %589 = vst [vmem:[%s264] sm:$0xff] %v508
        %590 = vst [vmem:[%s264 + $0x8] sm:$0xff] %v512
        %591 = vst [vmem:[%s264 + $0x10] sm:$0xff] %v586
      $region48: #{lif_recurrent_sequence.1} parent=31 // pred_fallthru
        _
      %s592 = sadd.s32 %s291, 3
      %p593 = scmp.lt.s32.totalorder %s592, 12
      // Predicated region
      $region49: #{lif_recurrent_sequence.1} parent=31 // pred_check
        %p594 = pneg %p593
      $region50: #{lif_recurrent_sequence.1} parent=31 // pred_check_branch
        %596 = sbr.rel (%p594) target = $region52
      $region51: #{lif_recurrent_sequence.1} parent=31 // pred_region
        %v597 = vld [vmem:[%s264] sm:$0xff]
        %v598 = vld [vmem:[%s264 + $0x8] sm:$0xff]
        %v599 = vld [vmem:[%s264 + $0x10] sm:$0xff]
        %v600 = vsub.f32 0.0, %v598
        %v601 = vadd.f32 %v600, %v599
        %v602 = vmul.f32 %v601, 0.1
        %v603 = vadd.f32 %v598, %v602
        %v604 = vmul.f32 %v599, 0.2
        %v605 = vsub.f32 %v599, %v604
        %v606 = vsub.f32 %v603, 1.0
        %vm607 = vcmp.gt.f32.partialorder %v606, 0.0
        %v608 = vsel %vm607, 1, 0
        %v609 = vcvt.s32.f32 %v608
        %v610 = vsub.f32 1.0, %v609
        %v611 = vmul.f32 %v610, %v603
        %v612 = vmul.f32 %v609, 0.0
        %v613 = vadd.f32 %v611, %v612
        %614 = vmatprep.subr.mxu0 0.0
        %615 = vmatpush1.msra.mxu0 %v275
        %616 = vmatprep.subr.mxu0 0.0
        %617 = vmatpush1.msra.mxu0 %v276
        %618 = vmatprep.subr.mxu0 0.0
        %619 = vmatpush1.msra.mxu0 %v277
        %620 = vmatprep.subr.mxu0 0.0
        %621 = vmatpush1.msra.mxu0 %v278
        %622 = vmatprep.subr.mxu0 0.0
        %623 = vmatpush1.msra.mxu0 %v279
        %624 = vmatprep.subr.mxu0 0.0
        %625 = vmatpush1.msra.mxu0 %v280
        %626 = vmatprep.subr.mxu0 0.0
        %627 = vmatpush1.msra.mxu0 %v281
        %628 = vmatprep.subr.mxu0 0.0
        %629 = vmatpush1.msra.mxu0 %v282
        %630 = vmatprep.subr.mxu0 0.0
        %631 = vmatpush1.msra.mxu0 %v283
        %632 = vmatprep.subr.mxu0 0.0
        %633 = vmatpush1.msra.mxu0 %v284
        %634 = vmatprep.subr.mxu0 0.0
        %635 = vmatpush1.msra.mxu0 %v285
        %636 = vmatprep.subr.mxu0 0.0
        %637 = vmatpush1.msra.mxu0 %v286
        %638 = vmatprep.subr.mxu0 0.0
        %639 = vmatpush1.msra.mxu0 %v287
        %640 = vmatprep.subr.mxu0 0.0
        %641 = vmatpush1.msra.mxu0 %v288
        %642 = vmatprep.subr.mxu0 0.0
        %643 = vmatpush1.msra.mxu0 %v289
        %644 = vmatprep.subr.mxu0 0.0
        %645 = vmatpush1.msra.mxu0 %v290
        %646 = vmatprep.subr.mxu0 0.0
        %647 = vmatpush1.msra.mxu0 0.0
        %648 = vmatprep.subr.mxu0 0.0
        %649 = vmatpush1.msra.mxu0 0.0
        %650 = vmatprep.subr.mxu0 0.0
        %651 = vmatpush1.msra.mxu0 0.0
        %652 = vmatprep.subr.mxu0 0.0
        %653 = vmatpush1.msra.mxu0 0.0
        %654 = vmatprep.subr.mxu0 0.0
        %655 = vmatpush1.msra.mxu0 0.0
        %656 = vmatprep.subr.mxu0 0.0
        %657 = vmatpush1.msra.mxu0 0.0
        %658 = vmatprep.subr.mxu0 0.0
        %659 = vmatpush1.msra.mxu0 0.0
        %660 = vmatprep.subr.mxu0 0.0
        %661 = vmatpush1.msra.mxu0 0.0
        %662 = vmatprep.subr.mxu0 0.0
        %663 = vmatpush1.msra.mxu0 0.0
        %664 = vmatprep.subr.mxu0 0.0
        %665 = vmatpush1.msra.mxu0 0.0
        %666 = vmatprep.subr.mxu0 0.0
        %667 = vmatpush1.msra.mxu0 0.0
        %668 = vmatprep.subr.mxu0 0.0
        %669 = vmatpush1.msra.mxu0 0.0
        %670 = vmatprep.subr.mxu0 0.0
        %671 = vmatpush1.msra.mxu0 0.0
        %672 = vmatprep.subr.mxu0 0.0
        %673 = vmatpush1.msra.mxu0 0.0
        %674 = vmatprep.subr.mxu0 0.0
        %675 = vmatpush1.msra.mxu0 0.0
        %676 = vmatprep.subr.mxu0 0.0
        %677 = vmatpush1.msra.mxu0 0.0
        %678 = vmatprep.mubr.f32.mxu0 0.0
        %679 = vmatmul.mubr.f32.gmra.mrb[0].mxu0 %v597
        %v680 = vpop.f32.mrb[0].mxu0
        %v681 = vadd.f32 0.0, %v680
        %v682 = vpop.f32.mrb[0].mxu0
        %683 = vdwg.mxu0
        %s684 = scalar_lea.vmem %s244, 24
        %v685 = vld [vmem:[%s684] sm:$0xff]
        %v686 = vadd.f32 %v605, %v685
        %v687 = vadd.f32 %v686, %v681
        %s688 = scalar_lea.vmem %s258, 24
        %689 = vst [vmem:[%s688] sm:$0xff] %v609
        %690 = vst [vmem:[%s264] sm:$0xff] %v609
        %691 = vst [vmem:[%s264 + $0x8] sm:$0xff] %v613
        %692 = vst [vmem:[%s264 + $0x10] sm:$0xff] %v687
      $region52: #{lif_recurrent_sequence.1} parent=31 // pred_fallthru
        _
      %s693 = sadd.s32 %s291, 4
      %p694 = scmp.lt.s32.totalorder %s693, 12
      // Predicated region
      $region53: #{lif_recurrent_sequence.1} parent=31 // pred_check
        %p695 = pneg %p694
      $region54: #{lif_recurrent_sequence.1} parent=31 // pred_check_branch
        %697 = sbr.rel (%p695) target = $region56
      $region55: #{lif_recurrent_sequence.1} parent=31 // pred_region
        %v698 = vld [vmem:[%s264] sm:$0xff]
        %v699 = vld [vmem:[%s264 + $0x8] sm:$0xff]
        %v700 = vld [vmem:[%s264 + $0x10] sm:$0xff]
        %v701 = vsub.f32 0.0, %v699
        %v702 = vadd.f32 %v701, %v700
        %v703 = vmul.f32 %v702, 0.1
        %v704 = vadd.f32 %v699, %v703
        %v705 = vmul.f32 %v700, 0.2
        %v706 = vsub.f32 %v700, %v705
        %v707 = vsub.f32 %v704, 1.0
        %vm708 = vcmp.gt.f32.partialorder %v707, 0.0
        %v709 = vsel %vm708, 1, 0
        %v710 = vcvt.s32.f32 %v709
        %v711 = vsub.f32 1.0, %v710
        %v712 = vmul.f32 %v711, %v704
        %v713 = vmul.f32 %v710, 0.0
        %v714 = vadd.f32 %v712, %v713
        %715 = vmatprep.subr.mxu0 0.0
        %716 = vmatpush1.msra.mxu0 %v275
        %717 = vmatprep.subr.mxu0 0.0
        %718 = vmatpush1.msra.mxu0 %v276
        %719 = vmatprep.subr.mxu0 0.0
        %720 = vmatpush1.msra.mxu0 %v277
        %721 = vmatprep.subr.mxu0 0.0
        %722 = vmatpush1.msra.mxu0 %v278
        %723 = vmatprep.subr.mxu0 0.0
        %724 = vmatpush1.msra.mxu0 %v279
        %725 = vmatprep.subr.mxu0 0.0
        %726 = vmatpush1.msra.mxu0 %v280
        %727 = vmatprep.subr.mxu0 0.0
        %728 = vmatpush1.msra.mxu0 %v281
        %729 = vmatprep.subr.mxu0 0.0
        %730 = vmatpush1.msra.mxu0 %v282
        %731 = vmatprep.subr.mxu0 0.0
        %732 = vmatpush1.msra.mxu0 %v283
        %733 = vmatprep.subr.mxu0 0.0
        %734 = vmatpush1.msra.mxu0 %v284
        %735 = vmatprep.subr.mxu0 0.0
        %736 = vmatpush1.msra.mxu0 %v285
        %737 = vmatprep.subr.mxu0 0.0
        %738 = vmatpush1.msra.mxu0 %v286
        %739 = vmatprep.subr.mxu0 0.0
        %740 = vmatpush1.msra.mxu0 %v287
        %741 = vmatprep.subr.mxu0 0.0
        %742 = vmatpush1.msra.mxu0 %v288
        %743 = vmatprep.subr.mxu0 0.0
        %744 = vmatpush1.msra.mxu0 %v289
        %745 = vmatprep.subr.mxu0 0.0
        %746 = vmatpush1.msra.mxu0 %v290
        %747 = vmatprep.subr.mxu0 0.0
        %748 = vmatpush1.msra.mxu0 0.0
        %749 = vmatprep.subr.mxu0 0.0
        %750 = vmatpush1.msra.mxu0 0.0
        %751 = vmatprep.subr.mxu0 0.0
        %752 = vmatpush1.msra.mxu0 0.0
        %753 = vmatprep.subr.mxu0 0.0
        %754 = vmatpush1.msra.mxu0 0.0
        %755 = vmatprep.subr.mxu0 0.0
        %756 = vmatpush1.msra.mxu0 0.0
        %757 = vmatprep.subr.mxu0 0.0
        %758 = vmatpush1.msra.mxu0 0.0
        %759 = vmatprep.subr.mxu0 0.0
        %760 = vmatpush1.msra.mxu0 0.0
        %761 = vmatprep.subr.mxu0 0.0
        %762 = vmatpush1.msra.mxu0 0.0
        %763 = vmatprep.subr.mxu0 0.0
        %764 = vmatpush1.msra.mxu0 0.0
        %765 = vmatprep.subr.mxu0 0.0
        %766 = vmatpush1.msra.mxu0 0.0
        %767 = vmatprep.subr.mxu0 0.0
        %768 = vmatpush1.msra.mxu0 0.0
        %769 = vmatprep.subr.mxu0 0.0
        %770 = vmatpush1.msra.mxu0 0.0
        %771 = vmatprep.subr.mxu0 0.0
        %772 = vmatpush1.msra.mxu0 0.0
        %773 = vmatprep.subr.mxu0 0.0
        %774 = vmatpush1.msra.mxu0 0.0
        %775 = vmatprep.subr.mxu0 0.0
        %776 = vmatpush1.msra.mxu0 0.0
        %777 = vmatprep.subr.mxu0 0.0
        %778 = vmatpush1.msra.mxu0 0.0
        %779 = vmatprep.mubr.f32.mxu0 0.0
        %780 = vmatmul.mubr.f32.gmra.mrb[0].mxu0 %v698
        %v781 = vpop.f32.mrb[0].mxu0
        %v782 = vadd.f32 0.0, %v781
        %v783 = vpop.f32.mrb[0].mxu0
        %784 = vdwg.mxu0
        %s785 = scalar_lea.vmem %s244, 32
        %v786 = vld [vmem:[%s785] sm:$0xff]
        %v787 = vadd.f32 %v706, %v786
        %v788 = vadd.f32 %v787, %v782
        %s789 = scalar_lea.vmem %s258, 32
        %790 = vst [vmem:[%s789] sm:$0xff] %v710
        %791 = vst [vmem:[%s264] sm:$0xff] %v710
        %792 = vst [vmem:[%s264 + $0x8] sm:$0xff] %v714
        %793 = vst [vmem:[%s264 + $0x10] sm:$0xff] %v788
      $region56: #{lif_recurrent_sequence.1} parent=31 // pred_fallthru
        _
      %s794 = sadd.s32 %s291, 5
      %p795 = scmp.lt.s32.totalorder %s794, 12
      // Predicated region
      $region57: #{lif_recurrent_sequence.1} parent=31 // pred_check
        %p796 = pneg %p795
      $region58: #{lif_recurrent_sequence.1} parent=31 // pred_check_branch
        %798 = sbr.rel (%p796) target = $region60
      $region59: #{lif_recurrent_sequence.1} parent=31 // pred_region
        %v799 = vld [vmem:[%s264] sm:$0xff]
        %v800 = vld [vmem:[%s264 + $0x8] sm:$0xff]
        %v801 = vld [vmem:[%s264 + $0x10] sm:$0xff]
        %v802 = vsub.f32 0.0, %v800
        %v803 = vadd.f32 %v802, %v801
        %v804 = vmul.f32 %v803, 0.1
        %v805 = vadd.f32 %v800, %v804
        %v806 = vmul.f32 %v801, 0.2
        %v807 = vsub.f32 %v801, %v806
        %v808 = vsub.f32 %v805, 1.0
        %vm809 = vcmp.gt.f32.partialorder %v808, 0.0
        %v810 = vsel %vm809, 1, 0
        %v811 = vcvt.s32.f32 %v810
        %v812 = vsub.f32 1.0, %v811
        %v813 = vmul.f32 %v812, %v805
        %v814 = vmul.f32 %v811, 0.0
        %v815 = vadd.f32 %v813, %v814
        %816 = vmatprep.subr.mxu0 0.0
        %817 = vmatpush1.msra.mxu0 %v275
        %818 = vmatprep.subr.mxu0 0.0
        %819 = vmatpush1.msra.mxu0 %v276
        %820 = vmatprep.subr.mxu0 0.0
        %821 = vmatpush1.msra.mxu0 %v277
        %822 = vmatprep.subr.mxu0 0.0
        %823 = vmatpush1.msra.mxu0 %v278
        %824 = vmatprep.subr.mxu0 0.0
        %825 = vmatpush1.msra.mxu0 %v279
        %826 = vmatprep.subr.mxu0 0.0
        %827 = vmatpush1.msra.mxu0 %v280
        %828 = vmatprep.subr.mxu0 0.0
        %829 = vmatpush1.msra.mxu0 %v281
        %830 = vmatprep.subr.mxu0 0.0
        %831 = vmatpush1.msra.mxu0 %v282
        %832 = vmatprep.subr.mxu0 0.0
        %833 = vmatpush1.msra.mxu0 %v283
        %834 = vmatprep.subr.mxu0 0.0
        %835 = vmatpush1.msra.mxu0 %v284
        %836 = vmatprep.subr.mxu0 0.0
        %837 = vmatpush1.msra.mxu0 %v285
        %838 = vmatprep.subr.mxu0 0.0
        %839 = vmatpush1.msra.mxu0 %v286
        %840 = vmatprep.subr.mxu0 0.0
        %841 = vmatpush1.msra.mxu0 %v287
        %842 = vmatprep.subr.mxu0 0.0
        %843 = vmatpush1.msra.mxu0 %v288
        %844 = vmatprep.subr.mxu0 0.0
        %845 = vmatpush1.msra.mxu0 %v289
        %846 = vmatprep.subr.mxu0 0.0
        %847 = vmatpush1.msra.mxu0 %v290
        %848 = vmatprep.subr.mxu0 0.0
        %849 = vmatpush1.msra.mxu0 0.0
        %850 = vmatprep.subr.mxu0 0.0
        %851 = vmatpush1.msra.mxu0 0.0
        %852 = vmatprep.subr.mxu0 0.0
        %853 = vmatpush1.msra.mxu0 0.0
        %854 = vmatprep.subr.mxu0 0.0
        %855 = vmatpush1.msra.mxu0 0.0
        %856 = vmatprep.subr.mxu0 0.0
        %857 = vmatpush1.msra.mxu0 0.0
        %858 = vmatprep.subr.mxu0 0.0
        %859 = vmatpush1.msra.mxu0 0.0
        %860 = vmatprep.subr.mxu0 0.0
        %861 = vmatpush1.msra.mxu0 0.0
        %862 = vmatprep.subr.mxu0 0.0
        %863 = vmatpush1.msra.mxu0 0.0
        %864 = vmatprep.subr.mxu0 0.0
        %865 = vmatpush1.msra.mxu0 0.0
        %866 = vmatprep.subr.mxu0 0.0
        %867 = vmatpush1.msra.mxu0 0.0
        %868 = vmatprep.subr.mxu0 0.0
        %869 = vmatpush1.msra.mxu0 0.0
        %870 = vmatprep.subr.mxu0 0.0
        %871 = vmatpush1.msra.mxu0 0.0
        %872 = vmatprep.subr.mxu0 0.0
        %873 = vmatpush1.msra.mxu0 0.0
        %874 = vmatprep.subr.mxu0 0.0
        %875 = vmatpush1.msra.mxu0 0.0
        %876 = vmatprep.subr.mxu0 0.0
        %877 = vmatpush1.msra.mxu0 0.0
        %878 = vmatprep.subr.mxu0 0.0
        %879 = vmatpush1.msra.mxu0 0.0
        %880 = vmatprep.mubr.f32.mxu0 0.0
        %881 = vmatmul.mubr.f32.gmra.mrb[0].mxu0 %v799
        %v882 = vpop.f32.mrb[0].mxu0
        %v883 = vadd.f32 0.0, %v882
        %v884 = vpop.f32.mrb[0].mxu0
        %885 = vdwg.mxu0
        %s886 = scalar_lea.vmem %s244, 40
        %v887 = vld [vmem:[%s886] sm:$0xff]
        %v888 = vadd.f32 %v807, %v887
        %v889 = vadd.f32 %v888, %v883
        %s890 = scalar_lea.vmem %s258, 40
        %891 = vst [vmem:[%s890] sm:$0xff] %v811
        %892 = vst [vmem:[%s264] sm:$0xff] %v811
        %893 = vst [vmem:[%s264 + $0x8] sm:$0xff] %v815
        %894 = vst [vmem:[%s264 + $0x10] sm:$0xff] %v889
      $region60: #{lif_recurrent_sequence.1} parent=31 // pred_fallthru
        _
      %s895 = sadd.s32 %s291, 6
      %p896 = scmp.lt.s32.totalorder %s895, 12
      // Predicated region
      $region61: #{lif_recurrent_sequence.1} parent=31 // pred_check
        %p897 = pneg %p896
      $region62: #{lif_recurrent_sequence.1} parent=31 // pred_check_branch
        %899 = sbr.rel (%p897) target = $region64
      $region63: #{lif_recurrent_sequence.1} parent=31 // pred_region
        %v900 = vld [vmem:[%s264] sm:$0xff]
        %v901 = vld [vmem:[%s264 + $0x8] sm:$0xff]
        %v902 = vld [vmem:[%s264 + $0x10] sm:$0xff]
        %v903 = vsub.f32 0.0, %v901
        %v904 = vadd.f32 %v903, %v902
        %v905 = vmul.f32 %v904, 0.1
        %v906 = vadd.f32 %v901, %v905
        %v907 = vmul.f32 %v902, 0.2
        %v908 = vsub.f32 %v902, %v907
        %v909 = vsub.f32 %v906, 1.0
        %vm910 = vcmp.gt.f32.partialorder %v909, 0.0
        %v911 = vsel %vm910, 1, 0
        %v912 = vcvt.s32.f32 %v911
        %v913 = vsub.f32 1.0, %v912
        %v914 = vmul.f32 %v913, %v906
        %v915 = vmul.f32 %v912, 0.0
        %v916 = vadd.f32 %v914, %v915
        %917 = vmatprep.subr.mxu0 0.0
        %918 = vmatpush1.msra.mxu0 %v275
        %919 = vmatprep.subr.mxu0 0.0
        %920 = vmatpush1.msra.mxu0 %v276
        %921 = vmatprep.subr.mxu0 0.0
        %922 = vmatpush1.msra.mxu0 %v277
        %923 = vmatprep.subr.mxu0 0.0
        %924 = vmatpush1.msra.mxu0 %v278
        %925 = vmatprep.subr.mxu0 0.0
        %926 = vmatpush1.msra.mxu0 %v279
        %927 = vmatprep.subr.mxu0 0.0
        %928 = vmatpush1.msra.mxu0 %v280
        %929 = vmatprep.subr.mxu0 0.0
        %930 = vmatpush1.msra.mxu0 %v281
        %931 = vmatprep.subr.mxu0 0.0
        %932 = vmatpush1.msra.mxu0 %v282
        %933 = vmatprep.subr.mxu0 0.0
        %934 = vmatpush1.msra.mxu0 %v283
        %935 = vmatprep.subr.mxu0 0.0
        %936 = vmatpush1.msra.mxu0 %v284
        %937 = vmatprep.subr.mxu0 0.0
        %938 = vmatpush1.msra.mxu0 %v285
        %939 = vmatprep.subr.mxu0 0.0
        %940 = vmatpush1.msra.mxu0 %v286
        %941 = vmatprep.subr.mxu0 0.0
        %942 = vmatpush1.msra.mxu0 %v287
        %943 = vmatprep.subr.mxu0 0.0
        %944 = vmatpush1.msra.mxu0 %v288
        %945 = vmatprep.subr.mxu0 0.0
        %946 = vmatpush1.msra.mxu0 %v289
        %947 = vmatprep.subr.mxu0 0.0
        %948 = vmatpush1.msra.mxu0 %v290
        %949 = vmatprep.subr.mxu0 0.0
        %950 = vmatpush1.msra.mxu0 0.0
        %951 = vmatprep.subr.mxu0 0.0
        %952 = vmatpush1.msra.mxu0 0.0
        %953 = vmatprep.subr.mxu0 0.0
        %954 = vmatpush1.msra.mxu0 0.0
        %955 = vmatprep.subr.mxu0 0.0
        %956 = vmatpush1.msra.mxu0 0.0
        %957 = vmatprep.subr.mxu0 0.0
        %958 = vmatpush1.msra.mxu0 0.0
        %959 = vmatprep.subr.mxu0 0.0
        %960 = vmatpush1.msra.mxu0 0.0
        %961 = vmatprep.subr.mxu0 0.0
        %962 = vmatpush1.msra.mxu0 0.0
        %963 = vmatprep.subr.mxu0 0.0
        %964 = vmatpush1.msra.mxu0 0.0
        %965 = vmatprep.subr.mxu0 0.0
        %966 = vmatpush1.msra.mxu0 0.0
        %967 = vmatprep.subr.mxu0 0.0
        %968 = vmatpush1.msra.mxu0 0.0
        %969 = vmatprep.subr.mxu0 0.0
        %970 = vmatpush1.msra.mxu0 0.0
        %971 = vmatprep.subr.mxu0 0.0
        %972 = vmatpush1.msra.mxu0 0.0
        %973 = vmatprep.subr.mxu0 0.0
        %974 = vmatpush1.msra.mxu0 0.0
        %975 = vmatprep.subr.mxu0 0.0
        %976 = vmatpush1.msra.mxu0 0.0
        %977 = vmatprep.subr.mxu0 0.0
        %978 = vmatpush1.msra.mxu0 0.0
        %979 = vmatprep.subr.mxu0 0.0
        %980 = vmatpush1.msra.mxu0 0.0
        %981 = vmatprep.mubr.f32.mxu0 0.0
        %982 = vmatmul.mubr.f32.gmra.mrb[0].mxu0 %v900
        %v983 = vpop.f32.mrb[0].mxu0
        %v984 = vadd.f32 0.0, %v983
        %v985 = vpop.f32.mrb[0].mxu0
        %986 = vdwg.mxu0
        %s987 = scalar_lea.vmem %s244, 48
        %v988 = vld [vmem:[%s987] sm:$0xff]
        %v989 = vadd.f32 %v908, %v988
        %v990 = vadd.f32 %v989, %v984
        %s991 = scalar_lea.vmem %s258, 48
        %992 = vst [vmem:[%s991] sm:$0xff] %v912
        %993 = vst [vmem:[%s264] sm:$0xff] %v912
        %994 = vst [vmem:[%s264 + $0x8] sm:$0xff] %v916
        %995 = vst [vmem:[%s264 + $0x10] sm:$0xff] %v990
      $region64: #{lif_recurrent_sequence.1} parent=31 // pred_fallthru
        _
      %s996 = sadd.s32 %s291, 7
      %p997 = scmp.lt.s32.totalorder %s996, 12
      // Predicated region
      $region65: #{lif_recurrent_sequence.1} parent=31 // pred_check
        %p998 = pneg %p997
      $region66: #{lif_recurrent_sequence.1} parent=31 // pred_check_branch
        %1000 = sbr.rel (%p998) target = $region68
      $region67: #{lif_recurrent_sequence.1} parent=31 // pred_region
        %v1001 = vld [vmem:[%s264] sm:$0xff]
        %v1002 = vld [vmem:[%s264 + $0x8] sm:$0xff]
        %v1003 = vld [vmem:[%s264 + $0x10] sm:$0xff]
        %v1004 = vsub.f32 0.0, %v1002
        %v1005 = vadd.f32 %v1004, %v1003
        %v1006 = vmul.f32 %v1005, 0.1
        %v1007 = vadd.f32 %v1002, %v1006
        %v1008 = vmul.f32 %v1003, 0.2
        %v1009 = vsub.f32 %v1003, %v1008
        %v1010 = vsub.f32 %v1007, 1.0
        %vm1011 = vcmp.gt.f32.partialorder %v1010, 0.0
        %v1012 = vsel %vm1011, 1, 0
        %v1013 = vcvt.s32.f32 %v1012
        %v1014 = vsub.f32 1.0, %v1013
        %v1015 = vmul.f32 %v1014, %v1007
        %v1016 = vmul.f32 %v1013, 0.0
        %v1017 = vadd.f32 %v1015, %v1016
        %1018 = vmatprep.subr.mxu0 0.0
        %1019 = vmatpush1.msra.mxu0 %v275
        %1020 = vmatprep.subr.mxu0 0.0
        %1021 = vmatpush1.msra.mxu0 %v276
        %1022 = vmatprep.subr.mxu0 0.0
        %1023 = vmatpush1.msra.mxu0 %v277
        %1024 = vmatprep.subr.mxu0 0.0
        %1025 = vmatpush1.msra.mxu0 %v278
        %1026 = vmatprep.subr.mxu0 0.0
        %1027 = vmatpush1.msra.mxu0 %v279
        %1028 = vmatprep.subr.mxu0 0.0
        %1029 = vmatpush1.msra.mxu0 %v280
        %1030 = vmatprep.subr.mxu0 0.0
        %1031 = vmatpush1.msra.mxu0 %v281
        %1032 = vmatprep.subr.mxu0 0.0
        %1033 = vmatpush1.msra.mxu0 %v282
        %1034 = vmatprep.subr.mxu0 0.0
        %1035 = vmatpush1.msra.mxu0 %v283
        %1036 = vmatprep.subr.mxu0 0.0
        %1037 = vmatpush1.msra.mxu0 %v284
        %1038 = vmatprep.subr.mxu0 0.0
        %1039 = vmatpush1.msra.mxu0 %v285
        %1040 = vmatprep.subr.mxu0 0.0
        %1041 = vmatpush1.msra.mxu0 %v286
        %1042 = vmatprep.subr.mxu0 0.0
        %1043 = vmatpush1.msra.mxu0 %v287
        %1044 = vmatprep.subr.mxu0 0.0
        %1045 = vmatpush1.msra.mxu0 %v288
        %1046 = vmatprep.subr.mxu0 0.0
        %1047 = vmatpush1.msra.mxu0 %v289
        %1048 = vmatprep.subr.mxu0 0.0
        %1049 = vmatpush1.msra.mxu0 %v290
        %1050 = vmatprep.subr.mxu0 0.0
        %1051 = vmatpush1.msra.mxu0 0.0
        %1052 = vmatprep.subr.mxu0 0.0
        %1053 = vmatpush1.msra.mxu0 0.0
        %1054 = vmatprep.subr.mxu0 0.0
        %1055 = vmatpush1.msra.mxu0 0.0
        %1056 = vmatprep.subr.mxu0 0.0
        %1057 = vmatpush1.msra.mxu0 0.0
        %1058 = vmatprep.subr.mxu0 0.0
        %1059 = vmatpush1.msra.mxu0 0.0
        %1060 = vmatprep.subr.mxu0 0.0
        %1061 = vmatpush1.msra.mxu0 0.0
        %1062 = vmatprep.subr.mxu0 0.0
        %1063 = vmatpush1.msra.mxu0 0.0
        %1064 = vmatprep.subr.mxu0 0.0
        %1065 = vmatpush1.msra.mxu0 0.0
        %1066 = vmatprep.subr.mxu0 0.0
        %1067 = vmatpush1.msra.mxu0 0.0
        %1068 = vmatprep.subr.mxu0 0.0
        %1069 = vmatpush1.msra.mxu0 0.0
        %1070 = vmatprep.subr.mxu0 0.0
        %1071 = vmatpush1.msra.mxu0 0.0
        %1072 = vmatprep.subr.mxu0 0.0
        %1073 = vmatpush1.msra.mxu0 0.0
        %1074 = vmatprep.subr.mxu0 0.0
        %1075 = vmatpush1.msra.mxu0 0.0
        %1076 = vmatprep.subr.mxu0 0.0
        %1077 = vmatpush1.msra.mxu0 0.0
        %1078 = vmatprep.subr.mxu0 0.0
        %1079 = vmatpush1.msra.mxu0 0.0
        %1080 = vmatprep.subr.mxu0 0.0
        %1081 = vmatpush1.msra.mxu0 0.0
        %1082 = vmatprep.mubr.f32.mxu0 0.0
        %1083 = vmatmul.mubr.f32.gmra.mrb[0].mxu0 %v1001
        %v1084 = vpop.f32.mrb[0].mxu0
        %v1085 = vadd.f32 0.0, %v1084
        %v1086 = vpop.f32.mrb[0].mxu0
        %1087 = vdwg.mxu0
        %s1088 = scalar_lea.vmem %s244, 56
        %v1089 = vld [vmem:[%s1088] sm:$0xff]
        %v1090 = vadd.f32 %v1009, %v1089
        %v1091 = vadd.f32 %v1090, %v1085
        %s1092 = scalar_lea.vmem %s258, 56
        %1093 = vst [vmem:[%s1092] sm:$0xff] %v1013
        %1094 = vst [vmem:[%s264] sm:$0xff] %v1013
        %1095 = vst [vmem:[%s264 + $0x8] sm:$0xff] %v1017
        %1096 = vst [vmem:[%s264 + $0x10] sm:$0xff] %v1091
      $region68: #{lif_recurrent_sequence.1} parent=31 // pred_fallthru
        _
      %s1097 = smul.u32 8, %s21
      %p1098 = scmp.lt.s32.totalorder %s1097, 15
      %s1099 = scalar_select %p1098, %s1097, 15
      %p1100 = scmp.lt.s32.totalorder %s20, 0
      %s1101 = scalar_select %p1100, %s20, 0
      %s1102 = sadd.s32 %s1101, %s1099
      %s1103 = smul.addr %s1102, 8
      %s1104 = scalar_lea.vmem %s3, %s1103
      %p1105 = scmp.lt.s32.totalorder %s20, 0
      %s1106 = scalar_select %p1105, %s20, 0
      %s1107 = smul.addr %s1106, 3
      %s1108 = smul.addr %s1107, 8
      %s1109 = scalar_lea.vmem %s4, %s1108
      // Predicated region
      $region69: #{lif_recurrent_sequence.1} parent=31 // pred_check
        %p1110 = pneg %p123
      $region70: #{lif_recurrent_sequence.1} parent=31 // pred_check_branch
        %1112 = sbr.rel (%p1110) target = $region72
      $region71: #{lif_recurrent_sequence.1} parent=31 // pred_region
        %s1113 = smul.u32 8, %s21
      $region72: #{lif_recurrent_sequence.1} parent=31 // pred_fallthru
        _
      // Predicated region
      $region73: #{lif_recurrent_sequence.1} parent=31 // pred_check
        %p1114 = pneg %p149
      $region74: #{lif_recurrent_sequence.1} parent=31 // pred_check_branch
        %1116 = sbr.rel (%p1114) target = $region76
      $region75: #{lif_recurrent_sequence.1} parent=31 // pred_region
        _
      $region76: #{lif_recurrent_sequence.1} parent=31 // pred_fallthru
        _
      // Predicated region
      $region77: #{lif_recurrent_sequence.1} parent=31 // pred_check
        %p1117 = pneg %p149
      $region78: #{lif_recurrent_sequence.1} parent=31 // pred_check_branch
        %1119 = sbr.rel (%p1117) target = $region80
      $region79: #{lif_recurrent_sequence.1} parent=31 // pred_region
        %p1120 = scmp.lt.s32.totalorder %s20, 0
        %s1121 = scalar_select %p1120, %s20, 0
        %s1122 = smul.addr %s1121, 3
        %s1123 = smul.addr %s1122, 8
        %s1124 = scalar_lea.vmem %s4, %s1123
      $region80: #{lif_recurrent_sequence.1} parent=31 // pred_fallthru
        _
    $region32: #{lif_recurrent_sequence.1} parent=5 // pred_fallthru
      _
    %p1125 = scmp.le.s32.totalorder 2, %s11
    // Predicated region
    $region81: #{lif_recurrent_sequence.1} parent=5 // pred_check
      %p1126 = pneg %p1125
    $region82: #{lif_recurrent_sequence.1} parent=5 // pred_check_branch
      %1128 = sbr.rel (%p1126) target = $region84
    $region83: #{lif_recurrent_sequence.1} parent=5 // pred_region
      %s1129 = ssub.s32 %s11, 2
      // Predicated region
      $region85: #{lif_recurrent_sequence.1} parent=83 // pred_check
        %p1130 = pneg %p129
      $region86: #{lif_recurrent_sequence.1} parent=83 // pred_check_branch
        %1132 = sbr.rel (%p1130) target = $region88
      $region87: #{lif_recurrent_sequence.1} parent=83 // pred_region
        %s1133 = smul.u32 8, %s23
        %p1134 = scmp.lt.s32.totalorder %s1133, 15
        %s1135 = scalar_select %p1134, %s1133, 15
        %p1136 = scmp.lt.s32.totalorder %s22, 0
        %s1137 = scalar_select %p1136, %s22, 0
        %s1138 = sadd.s32 %s1137, %s1135
        %s1139 = smul.addr %s1138, 8
        %s1140 = scalar_lea.vmem %s3, %s1139
      $region88: #{lif_recurrent_sequence.1} parent=83 // pred_fallthru
        _
    $region84: #{lif_recurrent_sequence.1} parent=5 // pred_fallthru
      _
  $region6: #{lif_recurrent_sequence.1} parent=0 // loop_footer
    %s15 = sadd.s32 1, %s11
  $region7: #{lif_recurrent_sequence.1} parent=0 // loop_footer_branch
    %10 = sbr.rel target = $region3
  $region8: #{lif_recurrent_sequence.1} parent=0 // loop_exit
    _

</llo_original>
